<compile_context>
chip_gen: v5e
topology: v5e:2x2
jax: 0.10.0
libtpu: 0.0.40
codegen_flags: <defaults>
</compile_context>

<pallas_src>
import jax
import jax.numpy as jnp
from jax.experimental import pallas as pl
from jax.experimental.pallas import tpu as pltpu

INPUT_DIM = 64
LATENT_DIM = 16
H1 = 256
H2 = 128

SLAB_W = 128          # packed input lanes:  [x(64) | eps(16) | zero pad(48)]
OUT_W = 128           # packed output lanes: [recon(64) | mu(16) | log_var(16) | zero(32)]
EPS_LO, EPS_HI = INPUT_DIM, INPUT_DIM + LATENT_DIM          # 64:80
MU_LO, MU_HI = INPUT_DIM, INPUT_DIM + LATENT_DIM            # 64:80
LV_LO, LV_HI = INPUT_DIM + LATENT_DIM, INPUT_DIM + 2 * LATENT_DIM  # 80:96

BATCH = 256           # example batch in __main__


def _vae_kernel(
    in_ref,
    ew1_ref, eb1_ref, ew2_ref, eb2_ref, ew3_ref, eb3_ref,
    dw1_ref, db1_ref, dw2_ref, db2_ref, dw3_ref, db3_ref,
    out_ref,
):
    slab = in_ref[...]                              # (BT, 128) f32: [x | eps | 0]
    slab_bf = slab.astype(jnp.bfloat16)

    # ---- encoder: Linear -> ReLU -> Linear -> ReLU -> packed head Linear ----
    # ew1 is zero-padded to (128, 256); eps/pad lanes hit zero rows, so this is
    # exactly x @ W1 (no in-kernel lane slicing of x).
    h = jnp.dot(slab_bf, ew1_ref[...], preferred_element_type=jnp.float32) + eb1_ref[...]
    h = jnp.maximum(h, 0.0).astype(jnp.bfloat16)    # (BT, 256)
    h = jnp.dot(h, ew2_ref[...], preferred_element_type=jnp.float32) + eb2_ref[...]
    h = jnp.maximum(h, 0.0).astype(jnp.bfloat16)    # (BT, 128)

    # Single lane-placed head matmul: mu lands at lanes 64:80, log_var at 80:96,
    # all other lanes are exactly zero (zero weight cols + zero bias).
    head = jnp.dot(h, ew3_ref[...], preferred_element_type=jnp.float32) + eb3_ref[...]

    # ---- reparameterize: z = mu + eps * exp(0.5 * log_var)  (f32, exp on EUP) ----
    mu = head[:, MU_LO:MU_HI]                       # (BT, 16) f32
    log_var = head[:, LV_LO:LV_HI]                  # (BT, 16) f32
    eps = slab[:, EPS_LO:EPS_HI]                    # (BT, 16) f32
    z = (mu + eps * jnp.exp(0.5 * log_var)).astype(jnp.bfloat16)

    # ---- decoder: Linear -> ReLU -> Linear -> ReLU -> Linear (lane-padded) ----
    d = jnp.dot(z, dw1_ref[...], preferred_element_type=jnp.float32) + db1_ref[...]
    d = jnp.maximum(d, 0.0).astype(jnp.bfloat16)    # (BT, 128)
    d = jnp.dot(d, dw2_ref[...], preferred_element_type=jnp.float32) + db2_ref[...]
    d = jnp.maximum(d, 0.0).astype(jnp.bfloat16)    # (BT, 256)
    # dw3/db3 are zero on output lanes 64:127 -> recon lanes 64:127 are exactly 0.
    recon = jnp.dot(d, dw3_ref[...], preferred_element_type=jnp.float32) + db3_ref[...]

    # Arithmetic packing: one unmasked full-lane (BT, 128) store.
    # lanes 0:64 = recon, 64:80 = mu, 80:96 = log_var, 96:128 = 0.
    out_ref[...] = recon + head


def _pick_block_b(B):
    """Aim for exactly 2 grid steps (feeds both v7x TensorCores; costs one extra
    ~0.4us step on 1-TC v5e/v6e, negligible). Tiles are multiples of 128 rows,
    capped at 1024 (VMEM stays far under limit either way)."""
    half = -(-B // 2)
    bt = -(-half // 128) * 128
    return max(128, min(1024, bt))


def vae_forward(x, eps, kparams, *, block_b=None):
    """x: (B, INPUT_DIM), eps: (B, LATENT_DIM), kparams: output of prep_params().
    Returns (recon, mu, log_var), each f32."""
    B = x.shape[0]
    if block_b is None:
        block_b = _pick_block_b(B)
    Bp = ((B + block_b - 1) // block_b) * block_b

    # Single lane-dense packed input slab (one DMA per tile instead of two narrow ones).
    slab = jnp.zeros((Bp, SLAB_W), jnp.float32)
    slab = slab.at[:B, :INPUT_DIM].set(x.astype(jnp.float32))
    slab = slab.at[:B, EPS_LO:EPS_HI].set(eps.astype(jnp.float32))

    args = (
        slab,
        kparams["ew1"], kparams["eb1"], kparams["ew2"], kparams["eb2"],
        kparams["ew3"], kparams["eb3"],
        kparams["dw1"], kparams["db1"], kparams["dw2"], kparams["db2"],
        kparams["dw3"], kparams["db3"],
    )

    def tile_spec(width):
        return pl.BlockSpec((block_b, width), lambda i: (i, 0))

    def resident_spec(arr):
        # Same block every grid step -> weight DMA'd once, stays VMEM-resident.
        return pl.BlockSpec(arr.shape, lambda i: (0, 0))

    in_specs = [tile_spec(SLAB_W)] + [resident_spec(a) for a in args[1:]]

    packed = pl.pallas_call(
        _vae_kernel,
        grid=(Bp // block_b,),
        out_shape=jax.ShapeDtypeStruct((Bp, OUT_W), jnp.float32),
        in_specs=in_specs,
        out_specs=tile_spec(OUT_W),
        compiler_params=pltpu.CompilerParams(dimension_semantics=("parallel",)),
    )(*args)

    recon = packed[:B, :INPUT_DIM]
    mu = packed[:B, MU_LO:MU_HI]
    log_var = packed[:B, LV_LO:LV_HI]
    return recon, mu, log_var


def init_params(key):
    """Deterministic synthetic f32 parameters. Linear layers as (in, out) + (1, out)."""
    dims = {
        "ew1": (INPUT_DIM, H1), "ew2": (H1, H2), "ew3": (H2, 2 * LATENT_DIM),
        "dw1": (LATENT_DIM, H2), "dw2": (H2, H1), "dw3": (H1, INPUT_DIM),
    }
    params = {}
    keys = jax.random.split(key, 2 * len(dims))
    for idx, (name, (fan_in, fan_out)) in enumerate(sorted(dims.items())):
        bound = 1.0 / jnp.sqrt(fan_in)  # matches PyTorch Linear init scale
        params[name] = jax.random.uniform(
            keys[2 * idx], (fan_in, fan_out), jnp.float32, minval=-bound, maxval=bound
        )
        params[name.replace("w", "b")] = jax.random.uniform(
            keys[2 * idx + 1], (1, fan_out), jnp.float32, minval=-bound, maxval=bound
        )
    return params


def prep_params(p32):
    """Cast weights to bf16 and pre-pad them into the packed lane layouts:
       * ew1 zero-padded to (128, 256) so the packed input slab feeds it directly,
       * ew3/eb3 merged head padded to 128 output lanes (mu at 64:80, log_var at 80:96),
       * dw3/db3 zero-padded to 128 output lanes (recon at 0:64)."""
    bf = lambda a: a.astype(jnp.bfloat16)
    f32 = lambda a: a.astype(jnp.float32)

    ew1_pad = jnp.zeros((SLAB_W, H1), jnp.float32).at[:INPUT_DIM, :].set(p32["ew1"])

    ew3_pad = jnp.zeros((H2, OUT_W), jnp.float32)
    ew3_pad = ew3_pad.at[:, MU_LO:MU_HI].set(p32["ew3"][:, :LATENT_DIM])
    ew3_pad = ew3_pad.at[:, LV_LO:LV_HI].set(p32["ew3"][:, LATENT_DIM:])
    eb3_pad = jnp.zeros((1, OUT_W), jnp.float32)
    eb3_pad = eb3_pad.at[:, MU_LO:MU_HI].set(p32["eb3"][:, :LATENT_DIM])
    eb3_pad = eb3_pad.at[:, LV_LO:LV_HI].set(p32["eb3"][:, LATENT_DIM:])

    dw3_pad = jnp.zeros((H1, OUT_W), jnp.float32).at[:, :INPUT_DIM].set(p32["dw3"])
    db3_pad = jnp.zeros((1, OUT_W), jnp.float32).at[:, :INPUT_DIM].set(p32["db3"])

    return {
        "ew1": bf(ew1_pad), "eb1": f32(p32["eb1"]),
        "ew2": bf(p32["ew2"]), "eb2": f32(p32["eb2"]),
        "ew3": bf(ew3_pad), "eb3": eb3_pad,
        "dw1": bf(p32["dw1"]), "db1": f32(p32["db1"]),
        "dw2": bf(p32["dw2"]), "db2": f32(p32["db2"]),
        "dw3": bf(dw3_pad), "db3": db3_pad,
    }


def vae_reference(x, eps, p32):
    """Plain-JAX f32 reference (weights/x rounded to bf16 to match kernel quantization)."""
    q = lambda a: a.astype(jnp.bfloat16).astype(jnp.float32)
    xq = q(x)
    h = jnp.maximum(xq @ q(p32["ew1"]) + p32["eb1"], 0.0)
    h = jnp.maximum(h @ q(p32["ew2"]) + p32["eb2"], 0.0)
    h = h @ q(p32["ew3"]) + p32["eb3"]
    mu, log_var = h[:, :LATENT_DIM], h[:, LATENT_DIM:]
    z = mu + eps * jnp.exp(0.5 * log_var)
    d = jnp.maximum(z @ q(p32["dw1"]) + p32["db1"], 0.0)
    d = jnp.maximum(d @ q(p32["dw2"]) + p32["db2"], 0.0)
    recon = d @ q(p32["dw3"]) + p32["db3"]
    return recon, mu, log_var


if __name__ == "__main__":
    key = jax.random.PRNGKey(0)
    k_x, k_eps, k_p = jax.random.split(key, 3)

    x = jax.random.normal(k_x, (BATCH, INPUT_DIM), jnp.float32)
    eps = jax.random.normal(k_eps, (BATCH, LATENT_DIM), jnp.float32)
    params32 = init_params(k_p)
    kparams = prep_params(params32)

    recon, mu, log_var = jax.block_until_ready(vae_forward(x, eps, kparams))

    r_ref, mu_ref, lv_ref = vae_reference(x, eps, params32)
    assert recon.shape == (BATCH, INPUT_DIM)
    assert mu.shape == (BATCH, LATENT_DIM) and log_var.shape == (BATCH, LATENT_DIM)
    # bf16 matmuls with f32 accumulation -> loosened tolerances vs. the pure-f32 reference.
    assert jnp.allclose(mu, mu_ref, atol=5e-2, rtol=5e-2)
    assert jnp.allclose(log_var, lv_ref, atol=5e-2, rtol=5e-2)
    assert jnp.allclose(recon, r_ref, atol=5e-2, rtol=5e-2)

    print("KERNEL_OK")
</pallas_src>

<mosaic_0001>
module attributes {stable_mosaic.version = 11 : i64} {
  func.func @_vae_kernel(%arg0: i32, %arg1: memref<128x128xf32, #tpu.memory_space<vmem>>, %arg2: memref<128x256xbf16, #tpu.memory_space<vmem>>, %arg3: memref<1x256xf32, #tpu.memory_space<vmem>>, %arg4: memref<256x128xbf16, #tpu.memory_space<vmem>>, %arg5: memref<1x128xf32, #tpu.memory_space<vmem>>, %arg6: memref<128x128xbf16, #tpu.memory_space<vmem>>, %arg7: memref<1x128xf32, #tpu.memory_space<vmem>>, %arg8: memref<16x128xbf16, #tpu.memory_space<vmem>>, %arg9: memref<1x128xf32, #tpu.memory_space<vmem>>, %arg10: memref<128x256xbf16, #tpu.memory_space<vmem>>, %arg11: memref<1x256xf32, #tpu.memory_space<vmem>>, %arg12: memref<256x128xbf16, #tpu.memory_space<vmem>>, %arg13: memref<1x128xf32, #tpu.memory_space<vmem>>, %arg14: memref<128x128xf32, #tpu.memory_space<vmem>>) attributes {dimension_semantics = [#tpu.dimension_semantics<parallel>], iteration_bounds = array<i64: 2>, scalar_prefetch = 0 : i64, scratch_operands = 0 : i64, tpu.core_type = #tpu.core_type<tc>, window_params = [{transform_indices = @transform_0, window_bounds = array<i64: 128, 128>}, {pipeline_mode = #tpu.pipeline_mode<synchronous>, transform_indices = @transform_1, window_bounds = array<i64: 128, 256>}, {pipeline_mode = #tpu.pipeline_mode<synchronous>, transform_indices = @transform_2, window_bounds = array<i64: 1, 256>}, {pipeline_mode = #tpu.pipeline_mode<synchronous>, transform_indices = @transform_3, window_bounds = array<i64: 256, 128>}, {pipeline_mode = #tpu.pipeline_mode<synchronous>, transform_indices = @transform_4, window_bounds = array<i64: 1, 128>}, {pipeline_mode = #tpu.pipeline_mode<synchronous>, transform_indices = @transform_5, window_bounds = array<i64: 128, 128>}, {pipeline_mode = #tpu.pipeline_mode<synchronous>, transform_indices = @transform_6, window_bounds = array<i64: 1, 128>}, {pipeline_mode = #tpu.pipeline_mode<synchronous>, transform_indices = @transform_7, window_bounds = array<i64: 16, 128>}, {pipeline_mode = #tpu.pipeline_mode<synchronous>, transform_indices = @transform_8, window_bounds = array<i64: 1, 128>}, {pipeline_mode = #tpu.pipeline_mode<synchronous>, transform_indices = @transform_9, window_bounds = array<i64: 128, 256>}, {pipeline_mode = #tpu.pipeline_mode<synchronous>, transform_indices = @transform_10, window_bounds = array<i64: 1, 256>}, {pipeline_mode = #tpu.pipeline_mode<synchronous>, transform_indices = @transform_11, window_bounds = array<i64: 256, 128>}, {pipeline_mode = #tpu.pipeline_mode<synchronous>, transform_indices = @transform_12, window_bounds = array<i64: 1, 128>}, {transform_indices = @transform_13, window_bounds = array<i64: 128, 128>}]} {
    %c0 = arith.constant 0 : index
    %c0_0 = arith.constant 0 : index
    %0 = vector.load %arg1[%c0, %c0_0] : memref<128x128xf32, #tpu.memory_space<vmem>>, vector<128x128xf32>
    %1 = arith.truncf %0 : vector<128x128xf32> to vector<128x128xbf16>
    %c0_1 = arith.constant 0 : index
    %c0_2 = arith.constant 0 : index
    %2 = vector.load %arg2[%c0_1, %c0_2] : memref<128x256xbf16, #tpu.memory_space<vmem>>, vector<128x256xbf16>
    %cst = arith.constant dense<0.000000e+00> : vector<128x256xf32>
    %3 = tpu.matmul %1, %2, %cst {dimension_numbers = #tpu.dot_dimension_numbers<[1], [0], [0], [1], [0, 0, 1, 1], [], []>} : vector<128x128xbf16>, vector<128x256xbf16>, vector<128x256xf32> -> vector<128x256xf32>
    %c0_3 = arith.constant 0 : index
    %c0_4 = arith.constant 0 : index
    %4 = vector.load %arg3[%c0_3, %c0_4] : memref<1x256xf32, #tpu.memory_space<vmem>>, vector<1x256xf32>
    %5 = vector.broadcast %4 : vector<1x256xf32> to vector<128x256xf32>
    %6 = arith.addf %3, %5 : vector<128x256xf32>
    %cst_5 = arith.constant 0.000000e+00 : f32
    %7 = vector.broadcast %cst_5 : f32 to vector<128x256xf32>
    %8 = arith.maximumf %6, %7 : vector<128x256xf32>
    %9 = arith.truncf %8 : vector<128x256xf32> to vector<128x256xbf16>
    %c0_6 = arith.constant 0 : index
    %c0_7 = arith.constant 0 : index
    %10 = vector.load %arg4[%c0_6, %c0_7] : memref<256x128xbf16, #tpu.memory_space<vmem>>, vector<256x128xbf16>
    %cst_8 = arith.constant dense<0.000000e+00> : vector<128x128xf32>
    %11 = tpu.matmul %9, %10, %cst_8 {dimension_numbers = #tpu.dot_dimension_numbers<[1], [0], [0], [1], [0, 0, 1, 1], [], []>} : vector<128x256xbf16>, vector<256x128xbf16>, vector<128x128xf32> -> vector<128x128xf32>
    %c0_9 = arith.constant 0 : index
    %c0_10 = arith.constant 0 : index
    %12 = vector.load %arg5[%c0_9, %c0_10] : memref<1x128xf32, #tpu.memory_space<vmem>>, vector<1x128xf32>
    %13 = vector.broadcast %12 : vector<1x128xf32> to vector<128x128xf32>
    %14 = arith.addf %11, %13 : vector<128x128xf32>
    %cst_11 = arith.constant 0.000000e+00 : f32
    %15 = vector.broadcast %cst_11 : f32 to vector<128x128xf32>
    %16 = arith.maximumf %14, %15 : vector<128x128xf32>
    %17 = arith.truncf %16 : vector<128x128xf32> to vector<128x128xbf16>
    %c0_12 = arith.constant 0 : index
    %c0_13 = arith.constant 0 : index
    %18 = vector.load %arg6[%c0_12, %c0_13] : memref<128x128xbf16, #tpu.memory_space<vmem>>, vector<128x128xbf16>
    %cst_14 = arith.constant dense<0.000000e+00> : vector<128x128xf32>
    %19 = tpu.matmul %17, %18, %cst_14 {dimension_numbers = #tpu.dot_dimension_numbers<[1], [0], [0], [1], [0, 0, 1, 1], [], []>} : vector<128x128xbf16>, vector<128x128xbf16>, vector<128x128xf32> -> vector<128x128xf32>
    %c0_15 = arith.constant 0 : index
    %c0_16 = arith.constant 0 : index
    %20 = vector.load %arg7[%c0_15, %c0_16] : memref<1x128xf32, #tpu.memory_space<vmem>>, vector<1x128xf32>
    %21 = vector.broadcast %20 : vector<1x128xf32> to vector<128x128xf32>
    %22 = arith.addf %19, %21 : vector<128x128xf32>
    %23 = vector.extract_strided_slice %22 {offsets = [0, 64], sizes = [128, 16], strides = [1, 1]} : vector<128x128xf32> to vector<128x16xf32>
    %24 = vector.extract_strided_slice %22 {offsets = [0, 80], sizes = [128, 16], strides = [1, 1]} : vector<128x128xf32> to vector<128x16xf32>
    %25 = vector.extract_strided_slice %0 {offsets = [0, 64], sizes = [128, 16], strides = [1, 1]} : vector<128x128xf32> to vector<128x16xf32>
    %cst_17 = arith.constant 5.000000e-01 : f32
    %26 = vector.broadcast %cst_17 : f32 to vector<128x16xf32>
    %27 = arith.mulf %26, %24 : vector<128x16xf32>
    %28 = math.exp %27 : vector<128x16xf32>
    %29 = arith.mulf %25, %28 : vector<128x16xf32>
    %30 = arith.addf %23, %29 : vector<128x16xf32>
    %31 = arith.truncf %30 : vector<128x16xf32> to vector<128x16xbf16>
    %c0_18 = arith.constant 0 : index
    %c0_19 = arith.constant 0 : index
    %32 = vector.load %arg8[%c0_18, %c0_19] : memref<16x128xbf16, #tpu.memory_space<vmem>>, vector<16x128xbf16>
    %cst_20 = arith.constant dense<0.000000e+00> : vector<128x128xf32>
    %33 = tpu.matmul %31, %32, %cst_20 {dimension_numbers = #tpu.dot_dimension_numbers<[1], [0], [0], [1], [0, 0, 1, 1], [], []>} : vector<128x16xbf16>, vector<16x128xbf16>, vector<128x128xf32> -> vector<128x128xf32>
    %c0_21 = arith.constant 0 : index
    %c0_22 = arith.constant 0 : index
    %34 = vector.load %arg9[%c0_21, %c0_22] : memref<1x128xf32, #tpu.memory_space<vmem>>, vector<1x128xf32>
    %35 = vector.broadcast %34 : vector<1x128xf32> to vector<128x128xf32>
    %36 = arith.addf %33, %35 : vector<128x128xf32>
    %cst_23 = arith.constant 0.000000e+00 : f32
    %37 = vector.broadcast %cst_23 : f32 to vector<128x128xf32>
    %38 = arith.maximumf %36, %37 : vector<128x128xf32>
    %39 = arith.truncf %38 : vector<128x128xf32> to vector<128x128xbf16>
    %c0_24 = arith.constant 0 : index
    %c0_25 = arith.constant 0 : index
    %40 = vector.load %arg10[%c0_24, %c0_25] : memref<128x256xbf16, #tpu.memory_space<vmem>>, vector<128x256xbf16>
    %cst_26 = arith.constant dense<0.000000e+00> : vector<128x256xf32>
    %41 = tpu.matmul %39, %40, %cst_26 {dimension_numbers = #tpu.dot_dimension_numbers<[1], [0], [0], [1], [0, 0, 1, 1], [], []>} : vector<128x128xbf16>, vector<128x256xbf16>, vector<128x256xf32> -> vector<128x256xf32>
    %c0_27 = arith.constant 0 : index
    %c0_28 = arith.constant 0 : index
    %42 = vector.load %arg11[%c0_27, %c0_28] : memref<1x256xf32, #tpu.memory_space<vmem>>, vector<1x256xf32>
    %43 = vector.broadcast %42 : vector<1x256xf32> to vector<128x256xf32>
    %44 = arith.addf %41, %43 : vector<128x256xf32>
    %cst_29 = arith.constant 0.000000e+00 : f32
    %45 = vector.broadcast %cst_29 : f32 to vector<128x256xf32>
    %46 = arith.maximumf %44, %45 : vector<128x256xf32>
    %47 = arith.truncf %46 : vector<128x256xf32> to vector<128x256xbf16>
    %c0_30 = arith.constant 0 : index
    %c0_31 = arith.constant 0 : index
    %48 = vector.load %arg12[%c0_30, %c0_31] : memref<256x128xbf16, #tpu.memory_space<vmem>>, vector<256x128xbf16>
    %cst_32 = arith.constant dense<0.000000e+00> : vector<128x128xf32>
    %49 = tpu.matmul %47, %48, %cst_32 {dimension_numbers = #tpu.dot_dimension_numbers<[1], [0], [0], [1], [0, 0, 1, 1], [], []>} : vector<128x256xbf16>, vector<256x128xbf16>, vector<128x128xf32> -> vector<128x128xf32>
    %c0_33 = arith.constant 0 : index
    %c0_34 = arith.constant 0 : index
    %50 = vector.load %arg13[%c0_33, %c0_34] : memref<1x128xf32, #tpu.memory_space<vmem>>, vector<1x128xf32>
    %51 = vector.broadcast %50 : vector<1x128xf32> to vector<128x128xf32>
    %52 = arith.addf %49, %51 : vector<128x128xf32>
    %53 = arith.addf %52, %22 : vector<128x128xf32>
    %c0_35 = arith.constant 0 : index
    %c0_36 = arith.constant 0 : index
    %54 = vector.load %arg14[%c0_35, %c0_36] : memref<128x128xf32, #tpu.memory_space<vmem>>, vector<128x128xf32>
    tpu.vector_store %arg14[%c0_35, %c0_36], %53 {strides = array<i32>} : memref<128x128xf32, #tpu.memory_space<vmem>>, vector<128x128xf32>,
    return
  }
  func.func @transform_0(%arg0: i32) -> (i32, i32) {
    %c0_i32 = arith.constant 0 : i32
    %c0_i32_0 = arith.constant 0 : i32
    return %arg0, %c0_i32 : i32, i32
  }
  func.func @transform_1(%arg0: i32) -> (i32, i32) {
    %c0_i32 = arith.constant 0 : i32
    %c0_i32_0 = arith.constant 0 : i32
    %c0_i32_1 = arith.constant 0 : i32
    return %c0_i32, %c0_i32_0 : i32, i32
  }
  func.func @transform_2(%arg0: i32) -> (i32, i32) {
    %c0_i32 = arith.constant 0 : i32
    %c0_i32_0 = arith.constant 0 : i32
    %c0_i32_1 = arith.constant 0 : i32
    return %c0_i32, %c0_i32_0 : i32, i32
  }
  func.func @transform_3(%arg0: i32) -> (i32, i32) {
    %c0_i32 = arith.constant 0 : i32
    %c0_i32_0 = arith.constant 0 : i32
    %c0_i32_1 = arith.constant 0 : i32
    return %c0_i32, %c0_i32_0 : i32, i32
  }
  func.func @transform_4(%arg0: i32) -> (i32, i32) {
    %c0_i32 = arith.constant 0 : i32
    %c0_i32_0 = arith.constant 0 : i32
    %c0_i32_1 = arith.constant 0 : i32
    return %c0_i32, %c0_i32_0 : i32, i32
  }
  func.func @transform_5(%arg0: i32) -> (i32, i32) {
    %c0_i32 = arith.constant 0 : i32
    %c0_i32_0 = arith.constant 0 : i32
    %c0_i32_1 = arith.constant 0 : i32
    return %c0_i32, %c0_i32_0 : i32, i32
  }
  func.func @transform_6(%arg0: i32) -> (i32, i32) {
    %c0_i32 = arith.constant 0 : i32
    %c0_i32_0 = arith.constant 0 : i32
    %c0_i32_1 = arith.constant 0 : i32
    return %c0_i32, %c0_i32_0 : i32, i32
  }
  func.func @transform_7(%arg0: i32) -> (i32, i32) {
    %c0_i32 = arith.constant 0 : i32
    %c0_i32_0 = arith.constant 0 : i32
    %c0_i32_1 = arith.constant 0 : i32
    return %c0_i32, %c0_i32_0 : i32, i32
  }
  func.func @transform_8(%arg0: i32) -> (i32, i32) {
    %c0_i32 = arith.constant 0 : i32
    %c0_i32_0 = arith.constant 0 : i32
    %c0_i32_1 = arith.constant 0 : i32
    return %c0_i32, %c0_i32_0 : i32, i32
  }
  func.func @transform_9(%arg0: i32) -> (i32, i32) {
    %c0_i32 = arith.constant 0 : i32
    %c0_i32_0 = arith.constant 0 : i32
    %c0_i32_1 = arith.constant 0 : i32
    return %c0_i32, %c0_i32_0 : i32, i32
  }
  func.func @transform_10(%arg0: i32) -> (i32, i32) {
    %c0_i32 = arith.constant 0 : i32
    %c0_i32_0 = arith.constant 0 : i32
    %c0_i32_1 = arith.constant 0 : i32
    return %c0_i32, %c0_i32_0 : i32, i32
  }
  func.func @transform_11(%arg0: i32) -> (i32, i32) {
    %c0_i32 = arith.constant 0 : i32
    %c0_i32_0 = arith.constant 0 : i32
    %c0_i32_1 = arith.constant 0 : i32
    return %c0_i32, %c0_i32_0 : i32, i32
  }
  func.func @transform_12(%arg0: i32) -> (i32, i32) {
    %c0_i32 = arith.constant 0 : i32
    %c0_i32_0 = arith.constant 0 : i32
    %c0_i32_1 = arith.constant 0 : i32
    return %c0_i32, %c0_i32_0 : i32, i32
  }
  func.func @transform_13(%arg0: i32) -> (i32, i32) {
    %c0_i32 = arith.constant 0 : i32
    %c0_i32_0 = arith.constant 0 : i32
    return %arg0, %c0_i32 : i32, i32
  }
}

</mosaic_0001>

<llo_original>
// kernel: tpu_custom_call.1
$region0: #{tpu_custom_call.1}
  #allocation0 [shape = 'u32[]', space=smem, size = 0x4, offset = 0x4, fixed_abs, tag = 'smem constant byte address 0x4 - core index']
  #allocation1 [shape = 'u32[72,128]{1,0:T(1,128)}', space=vmem, size = 0x9000, scoped, tag = 'internal scratch']
  %s0 = inlined_call_operand.hbm [shape: f32[256,128], index: 0, kind: input, shape index: {}]
  %s1 = inlined_call_operand.hbm [shape: bf16[128,256], index: 1, kind: input, shape index: {}]
  %s2 = inlined_call_operand.hbm [shape: f32[1,256], index: 2, kind: input, shape index: {}]
  %s3 = inlined_call_operand.hbm [shape: bf16[256,128], index: 3, kind: input, shape index: {}]
  %s4 = inlined_call_operand.vmem [shape: f32[1,128], index: 4, kind: input, shape index: {}]
  %s5 = inlined_call_operand.hbm [shape: bf16[128,128], index: 5, kind: input, shape index: {}]
  %s6 = inlined_call_operand.vmem [shape: f32[1,128], index: 6, kind: input, shape index: {}]
  %s7 = inlined_call_operand.hbm [shape: bf16[16,128], index: 7, kind: input, shape index: {}]
  %s8 = inlined_call_operand.vmem [shape: f32[1,128], index: 8, kind: input, shape index: {}]
  %s9 = inlined_call_operand.hbm [shape: bf16[128,256], index: 9, kind: input, shape index: {}]
  %s10 = inlined_call_operand.vmem [shape: f32[1,256], index: 10, kind: input, shape index: {}]
  %s11 = inlined_call_operand.hbm [shape: bf16[256,128], index: 11, kind: input, shape index: {}]
  %s12 = inlined_call_operand.vmem [shape: f32[1,128], index: 12, kind: input, shape index: {}]
  %s13 = inlined_call_operand.hbm [shape: f32[256,128], index: 13, kind: output, shape index: {}]
  %s14 = sld [smem:[#allocation0]]
  $region117: #{tpu_custom_call.1} parent=0
    _
  %s16 = ssub.s32 1, %s14
  %s17 = scalar_select 0, %s16, %s14
  $region1: #{tpu_custom_call.1} parent=0
    #allocation2 [shape = 'u8[131072]{0}', space=vmem, size = 0x20000, scoped, tag = 'input window, operand 0']
    #allocation3 [shape = 's32[2]{0}', space=sflag, size = 0x8, scoped, tag = 'scoped memory for tpu_custom_call.1']
    #allocation4 [shape = 's32[2]{0}', space=sflag, size = 0x8, scoped, tag = 'scoped memory for tpu_custom_call.1']
    #allocation5 [shape = 'u8[65536]{0}', space=vmem, size = 0x10000, scoped, tag = 'input window, operand 1, single buffered']
    #allocation6 [shape = 's32[1]{0}', space=sflag, size = 0x4, scoped, tag = 'scoped memory for tpu_custom_call.1']
    #allocation7 [shape = 'u8[1024]{0}', space=vmem, size = 0x400, scoped, tag = 'input window, operand 2, single buffered']
    #allocation8 [shape = 'u8[65536]{0}', space=vmem, size = 0x10000, scoped, tag = 'input window, operand 3, single buffered']
    #allocation9 [shape = 's32[1]{0}', space=sflag, size = 0x4, scoped, tag = 'scoped memory for tpu_custom_call.1']
    #allocation10 [shape = 'u8[32768]{0}', space=vmem, size = 0x8000, scoped, tag = 'input window, operand 5, single buffered']
    #allocation11 [shape = 'u8[4096]{0}', space=vmem, size = 0x1000, scoped, tag = 'input window, operand 7, single buffered']
    #allocation12 [shape = 's32[1]{0}', space=sflag, size = 0x4, scoped, tag = 'scoped memory for tpu_custom_call.1']
    #allocation13 [shape = 'u8[65536]{0}', space=vmem, size = 0x10000, scoped, tag = 'input window, operand 9, single buffered']
    #allocation14 [shape = 'u8[65536]{0}', space=vmem, size = 0x10000, scoped, tag = 'input window, operand 11, single buffered']
    #allocation15 [shape = 's32[1]{0}', space=sflag, size = 0x4, scoped, tag = 'scoped memory for tpu_custom_call.1']
    #allocation16 [shape = 'u8[131072]{0}', space=vmem, size = 0x20000, scoped, tag = 'output window, operand 0']
    %18 = vsyncpa [#allocation3], 0
    %s19 = scalar_lea.sflag [#allocation3], 1
    %20 = vsyncpa %s19, 0
    %21 = vsyncpa [#allocation6], 0
    %22 = vsyncpa [#allocation9], 0
    %23 = vsyncpa [#allocation12], 0
    %24 = vsyncpa [#allocation15], 0
    %25 = vsyncpa [#allocation4], 0
    %s26 = scalar_lea.sflag [#allocation4], 1
    %27 = vsyncpa %s26, 0
    loop: start=0, step=1, limit=4
    $region2: #{tpu_custom_call.1} parent=1 // loop_pre_header
      _
    $region3: #{tpu_custom_call.1} parent=1 // loop_header
      %s29 = sphi 0, %s33
      %p30 = scmp.ge.s32.totalorder %s29, 4
      %s39 = sphi 0, %s41
      %s42 = sphi 0, %s39
      %s43 = sphi 0, %s42
      %s59 = sphi 0, %s43
      %s63 = sphi 0, %s63
      %s65 = sphi 0, %s63
      %s66 = sphi 0, %s65
      %s80 = sphi 0, %s66
      %s84 = sphi 0, %s84
      %s86 = sphi 0, %s84
      %s87 = sphi 0, %s86
      %s101 = sphi 0, %s87
      %s105 = sphi 0, %s105
      %s107 = sphi 0, %s105
      %s108 = sphi 0, %s107
      %s122 = sphi 0, %s108
      %s126 = sphi 0, %s126
      %s128 = sphi 0, %s126
      %s129 = sphi 0, %s128
      %s143 = sphi 0, %s129
      %s147 = sphi 0, %s147
      %s149 = sphi 0, %s147
      %s150 = sphi 0, %s149
      %s164 = sphi 0, %s150
      %s168 = sphi 0, %s168
      %s170 = sphi 0, %s168
      %s171 = sphi 0, %s170
      %s185 = sphi 0, %s171
      %s189 = sphi 0, %s189
      %s191 = sphi 0, %s189
      %s192 = sphi 0, %s191
      %s206 = sphi 0, %s192
      %s210 = sphi 0, %s210
      %s212 = sphi 0, %s210
      %s213 = sphi 0, %s212
      %s227 = sphi 0, %s213
      %s231 = sphi 0, %s231
      %s233 = sphi 0, %s231
      %s234 = sphi 0, %s233
      %s248 = sphi 0, %s234
      %s252 = sphi 0, %s252
      %s254 = sphi 0, %s252
      %s255 = sphi 0, %s254
      %s269 = sphi 0, %s255
      %s273 = sphi 0, %s273
      %s275 = sphi 0, %s273
      %s276 = sphi 0, %s275
      %s290 = sphi 0, %s276
      %s294 = sphi 0, %s294
      %s296 = sphi 0, %s294
      %s297 = sphi 0, %s296
      %s311 = sphi 0, %s297
      %s317 = sphi 0, %s319
      %s320 = sphi 0, %s317
      %s321 = sphi 0, %s320
      %s337 = sphi 0, %s321
    $region4: #{tpu_custom_call.1} parent=1 // loop_header_branch
      %32 = sbr.rel (%p30) target = $region8
    $region5: #{tpu_custom_call.1} parent=1 // loop_body
      %s34 = ssub.s32 %s29, 1
      %s35 = ssub.s32 %s29, 2
      %s36 = sadd.s32 %s29, 1
      %s37 = ssub.s32 %s29, %s36
      %p38 = scmp.eq.s32.totalorder %s37, 0
      %s40 = sadd.s32 %s39, 1
      %s41 = scalar_select %p38, %s39, %s40
      %p44 = pneg %p38
      %p45 = scmp.eq.s32.totalorder %s29, 1
      %p46 = por %p44, %p45
      %p47 = scmp.ne.s32.totalorder %s39, %s42
      %p48 = scmp.eq.s32.totalorder %s29, 0
      %p49 = por %p47, %p48
      %p50 = scmp.ne.s32.totalorder %s39, %s42
      %p51 = scmp.eq.s32.totalorder %s34, 1
      %p52 = por %p50, %p51
      %p53 = scmp.ne.s32.totalorder %s42, %s43
      %p54 = scmp.eq.s32.totalorder %s34, 0
      %p55 = por %p53, %p54
      %p56 = scmp.ne.s32.totalorder %s42, %s43
      %p57 = scmp.eq.s32.totalorder %s35, 1
      %p58 = por %p56, %p57
      %p60 = scmp.ne.s32.totalorder %s43, %s59
      %p61 = scmp.eq.s32.totalorder %s35, 0
      %p62 = por %p60, %p61
      %s64 = sadd.s32 %s63, 1
      %p67 = scmp.eq.s32.totalorder %s29, 1
      %p68 = scmp.ne.s32.totalorder %s63, %s65
      %p69 = scmp.eq.s32.totalorder %s29, 0
      %p70 = por %p68, %p69
      %p71 = scmp.ne.s32.totalorder %s63, %s65
      %p72 = scmp.eq.s32.totalorder %s34, 1
      %p73 = por %p71, %p72
      %p74 = scmp.ne.s32.totalorder %s65, %s66
      %p75 = scmp.eq.s32.totalorder %s34, 0
      %p76 = por %p74, %p75
      %p77 = scmp.ne.s32.totalorder %s65, %s66
      %p78 = scmp.eq.s32.totalorder %s35, 1
      %p79 = por %p77, %p78
      %p81 = scmp.ne.s32.totalorder %s66, %s80
      %p82 = scmp.eq.s32.totalorder %s35, 0
      %p83 = por %p81, %p82
      %s85 = sadd.s32 %s84, 1
      %p88 = scmp.eq.s32.totalorder %s29, 1
      %p89 = scmp.ne.s32.totalorder %s84, %s86
      %p90 = scmp.eq.s32.totalorder %s29, 0
      %p91 = por %p89, %p90
      %p92 = scmp.ne.s32.totalorder %s84, %s86
      %p93 = scmp.eq.s32.totalorder %s34, 1
      %p94 = por %p92, %p93
      %p95 = scmp.ne.s32.totalorder %s86, %s87
      %p96 = scmp.eq.s32.totalorder %s34, 0
      %p97 = por %p95, %p96
      %p98 = scmp.ne.s32.totalorder %s86, %s87
      %p99 = scmp.eq.s32.totalorder %s35, 1
      %p100 = por %p98, %p99
      %p102 = scmp.ne.s32.totalorder %s87, %s101
      %p103 = scmp.eq.s32.totalorder %s35, 0
      %p104 = por %p102, %p103
      %s106 = sadd.s32 %s105, 1
      %p109 = scmp.eq.s32.totalorder %s29, 1
      %p110 = scmp.ne.s32.totalorder %s105, %s107
      %p111 = scmp.eq.s32.totalorder %s29, 0
      %p112 = por %p110, %p111
      %p113 = scmp.ne.s32.totalorder %s105, %s107
      %p114 = scmp.eq.s32.totalorder %s34, 1
      %p115 = por %p113, %p114
      %p116 = scmp.ne.s32.totalorder %s107, %s108
      %p117 = scmp.eq.s32.totalorder %s34, 0
      %p118 = por %p116, %p117
      %p119 = scmp.ne.s32.totalorder %s107, %s108
      %p120 = scmp.eq.s32.totalorder %s35, 1
      %p121 = por %p119, %p120
      %p123 = scmp.ne.s32.totalorder %s108, %s122
      %p124 = scmp.eq.s32.totalorder %s35, 0
      %p125 = por %p123, %p124
      %s127 = sadd.s32 %s126, 1
      %p130 = scmp.eq.s32.totalorder %s29, 1
      %p131 = scmp.ne.s32.totalorder %s126, %s128
      %p132 = scmp.eq.s32.totalorder %s29, 0
      %p133 = por %p131, %p132
      %p134 = scmp.ne.s32.totalorder %s126, %s128
      %p135 = scmp.eq.s32.totalorder %s34, 1
      %p136 = por %p134, %p135
      %p137 = scmp.ne.s32.totalorder %s128, %s129
      %p138 = scmp.eq.s32.totalorder %s34, 0
      %p139 = por %p137, %p138
      %p140 = scmp.ne.s32.totalorder %s128, %s129
      %p141 = scmp.eq.s32.totalorder %s35, 1
      %p142 = por %p140, %p141
      %p144 = scmp.ne.s32.totalorder %s129, %s143
      %p145 = scmp.eq.s32.totalorder %s35, 0
      %p146 = por %p144, %p145
      %s148 = sadd.s32 %s147, 1
      %p151 = scmp.eq.s32.totalorder %s29, 1
      %p152 = scmp.ne.s32.totalorder %s147, %s149
      %p153 = scmp.eq.s32.totalorder %s29, 0
      %p154 = por %p152, %p153
      %p155 = scmp.ne.s32.totalorder %s147, %s149
      %p156 = scmp.eq.s32.totalorder %s34, 1
      %p157 = por %p155, %p156
      %p158 = scmp.ne.s32.totalorder %s149, %s150
      %p159 = scmp.eq.s32.totalorder %s34, 0
      %p160 = por %p158, %p159
      %p161 = scmp.ne.s32.totalorder %s149, %s150
      %p162 = scmp.eq.s32.totalorder %s35, 1
      %p163 = por %p161, %p162
      %p165 = scmp.ne.s32.totalorder %s150, %s164
      %p166 = scmp.eq.s32.totalorder %s35, 0
      %p167 = por %p165, %p166
      %s169 = sadd.s32 %s168, 1
      %p172 = scmp.eq.s32.totalorder %s29, 1
      %p173 = scmp.ne.s32.totalorder %s168, %s170
      %p174 = scmp.eq.s32.totalorder %s29, 0
      %p175 = por %p173, %p174
      %p176 = scmp.ne.s32.totalorder %s168, %s170
      %p177 = scmp.eq.s32.totalorder %s34, 1
      %p178 = por %p176, %p177
      %p179 = scmp.ne.s32.totalorder %s170, %s171
      %p180 = scmp.eq.s32.totalorder %s34, 0
      %p181 = por %p179, %p180
      %p182 = scmp.ne.s32.totalorder %s170, %s171
      %p183 = scmp.eq.s32.totalorder %s35, 1
      %p184 = por %p182, %p183
      %p186 = scmp.ne.s32.totalorder %s171, %s185
      %p187 = scmp.eq.s32.totalorder %s35, 0
      %p188 = por %p186, %p187
      %s190 = sadd.s32 %s189, 1
      %p193 = scmp.eq.s32.totalorder %s29, 1
      %p194 = scmp.ne.s32.totalorder %s189, %s191
      %p195 = scmp.eq.s32.totalorder %s29, 0
      %p196 = por %p194, %p195
      %p197 = scmp.ne.s32.totalorder %s189, %s191
      %p198 = scmp.eq.s32.totalorder %s34, 1
      %p199 = por %p197, %p198
      %p200 = scmp.ne.s32.totalorder %s191, %s192
      %p201 = scmp.eq.s32.totalorder %s34, 0
      %p202 = por %p200, %p201
      %p203 = scmp.ne.s32.totalorder %s191, %s192
      %p204 = scmp.eq.s32.totalorder %s35, 1
      %p205 = por %p203, %p204
      %p207 = scmp.ne.s32.totalorder %s192, %s206
      %p208 = scmp.eq.s32.totalorder %s35, 0
      %p209 = por %p207, %p208
      %s211 = sadd.s32 %s210, 1
      %p214 = scmp.eq.s32.totalorder %s29, 1
      %p215 = scmp.ne.s32.totalorder %s210, %s212
      %p216 = scmp.eq.s32.totalorder %s29, 0
      %p217 = por %p215, %p216
      %p218 = scmp.ne.s32.totalorder %s210, %s212
      %p219 = scmp.eq.s32.totalorder %s34, 1
      %p220 = por %p218, %p219
      %p221 = scmp.ne.s32.totalorder %s212, %s213
      %p222 = scmp.eq.s32.totalorder %s34, 0
      %p223 = por %p221, %p222
      %p224 = scmp.ne.s32.totalorder %s212, %s213
      %p225 = scmp.eq.s32.totalorder %s35, 1
      %p226 = por %p224, %p225
      %p228 = scmp.ne.s32.totalorder %s213, %s227
      %p229 = scmp.eq.s32.totalorder %s35, 0
      %p230 = por %p228, %p229
      %s232 = sadd.s32 %s231, 1
      %p235 = scmp.eq.s32.totalorder %s29, 1
      %p236 = scmp.ne.s32.totalorder %s231, %s233
      %p237 = scmp.eq.s32.totalorder %s29, 0
      %p238 = por %p236, %p237
      %p239 = scmp.ne.s32.totalorder %s231, %s233
      %p240 = scmp.eq.s32.totalorder %s34, 1
      %p241 = por %p239, %p240
      %p242 = scmp.ne.s32.totalorder %s233, %s234
      %p243 = scmp.eq.s32.totalorder %s34, 0
      %p244 = por %p242, %p243
      %p245 = scmp.ne.s32.totalorder %s233, %s234
      %p246 = scmp.eq.s32.totalorder %s35, 1
      %p247 = por %p245, %p246
      %p249 = scmp.ne.s32.totalorder %s234, %s248
      %p250 = scmp.eq.s32.totalorder %s35, 0
      %p251 = por %p249, %p250
      %s253 = sadd.s32 %s252, 1
      %p256 = scmp.eq.s32.totalorder %s29, 1
      %p257 = scmp.ne.s32.totalorder %s252, %s254
      %p258 = scmp.eq.s32.totalorder %s29, 0
      %p259 = por %p257, %p258
      %p260 = scmp.ne.s32.totalorder %s252, %s254
      %p261 = scmp.eq.s32.totalorder %s34, 1
      %p262 = por %p260, %p261
      %p263 = scmp.ne.s32.totalorder %s254, %s255
      %p264 = scmp.eq.s32.totalorder %s34, 0
      %p265 = por %p263, %p264
      %p266 = scmp.ne.s32.totalorder %s254, %s255
      %p267 = scmp.eq.s32.totalorder %s35, 1
      %p268 = por %p266, %p267
      %p270 = scmp.ne.s32.totalorder %s255, %s269
      %p271 = scmp.eq.s32.totalorder %s35, 0
      %p272 = por %p270, %p271
      %s274 = sadd.s32 %s273, 1
      %p277 = scmp.eq.s32.totalorder %s29, 1
      %p278 = scmp.ne.s32.totalorder %s273, %s275
      %p279 = scmp.eq.s32.totalorder %s29, 0
      %p280 = por %p278, %p279
      %p281 = scmp.ne.s32.totalorder %s273, %s275
      %p282 = scmp.eq.s32.totalorder %s34, 1
      %p283 = por %p281, %p282
      %p284 = scmp.ne.s32.totalorder %s275, %s276
      %p285 = scmp.eq.s32.totalorder %s34, 0
      %p286 = por %p284, %p285
      %p287 = scmp.ne.s32.totalorder %s275, %s276
      %p288 = scmp.eq.s32.totalorder %s35, 1
      %p289 = por %p287, %p288
      %p291 = scmp.ne.s32.totalorder %s276, %s290
      %p292 = scmp.eq.s32.totalorder %s35, 0
      %p293 = por %p291, %p292
      %s295 = sadd.s32 %s294, 1
      %p298 = scmp.eq.s32.totalorder %s29, 1
      %p299 = scmp.ne.s32.totalorder %s294, %s296
      %p300 = scmp.eq.s32.totalorder %s29, 0
      %p301 = por %p299, %p300
      %p302 = scmp.ne.s32.totalorder %s294, %s296
      %p303 = scmp.eq.s32.totalorder %s34, 1
      %p304 = por %p302, %p303
      %p305 = scmp.ne.s32.totalorder %s296, %s297
      %p306 = scmp.eq.s32.totalorder %s34, 0
      %p307 = por %p305, %p306
      %p308 = scmp.ne.s32.totalorder %s296, %s297
      %p309 = scmp.eq.s32.totalorder %s35, 1
      %p310 = por %p308, %p309
      %p312 = scmp.ne.s32.totalorder %s297, %s311
      %p313 = scmp.eq.s32.totalorder %s35, 0
      %p314 = por %p312, %p313
      %s315 = ssub.s32 %s29, %s36
      %p316 = scmp.eq.s32.totalorder %s315, 0
      %s318 = sadd.s32 %s317, 1
      %s319 = scalar_select %p316, %s317, %s318
      %p322 = pneg %p316
      %p323 = scmp.eq.s32.totalorder %s29, 1
      %p324 = por %p322, %p323
      %p325 = scmp.ne.s32.totalorder %s317, %s320
      %p326 = scmp.eq.s32.totalorder %s29, 0
      %p327 = por %p325, %p326
      %p328 = scmp.ne.s32.totalorder %s317, %s320
      %p329 = scmp.eq.s32.totalorder %s34, 1
      %p330 = por %p328, %p329
      %p331 = scmp.ne.s32.totalorder %s320, %s321
      %p332 = scmp.eq.s32.totalorder %s34, 0
      %p333 = por %p331, %p332
      %p334 = scmp.ne.s32.totalorder %s320, %s321
      %p335 = scmp.eq.s32.totalorder %s35, 1
      %p336 = por %p334, %p335
      %p338 = scmp.ne.s32.totalorder %s321, %s337
      %p339 = scmp.eq.s32.totalorder %s35, 0
      %p340 = por %p338, %p339
      %p341 = scmp.le.s32.totalorder 1, %s29
      %p342 = scmp.lt.s32.totalorder %s29, 3
      %p343 = pnand %p341, %p342
      %p344 = pneg %p343
      // Predicated region
      $region9: #{tpu_custom_call.1} parent=5 // pred_check
        _
      $region10: #{tpu_custom_call.1} parent=5 // pred_check_branch
        %346 = sbr.rel (%p343) target = $region12
      $region11: #{tpu_custom_call.1} parent=5 // pred_region
        %s347 = ssub.s32 %s29, 1
        // Predicated region
        $region13: #{tpu_custom_call.1} parent=11 // pred_check
          %p348 = pneg %p76
        $region14: #{tpu_custom_call.1} parent=11 // pred_check_branch
          %350 = sbr.rel (%p348) target = $region16
        $region15: #{tpu_custom_call.1} parent=11 // pred_region
          %352 = vsyncadd [#allocation6], 0
          %s353 = sshll.u32 %s1, 4
          %s354 = int_to_ptr.hbm [resolvable:$true] %s353
          %s355 = sshll.u32 [#allocation5], 4
          %s356 = int_to_ptr.vmem [resolvable:$true] %s355
          %361 = dma.hbm_to_vmem [thread:$0]  %s354, 2048, %s356, [#allocation6], 128, 128, 8
        $region16: #{tpu_custom_call.1} parent=11 // pred_fallthru
          _
        // Predicated region
        $region17: #{tpu_custom_call.1} parent=11 // pred_check
          %p362 = pneg %p97
        $region18: #{tpu_custom_call.1} parent=11 // pred_check_branch
          %364 = sbr.rel (%p362) target = $region20
        $region19: #{tpu_custom_call.1} parent=11 // pred_region
          %366 = vsyncadd [#allocation6], 0
          %s368 = sshll.u32 %s2, 4
          %s369 = int_to_ptr.hbm [resolvable:$true] %s368
          %s370 = sshll.u32 [#allocation7], 4
          %s371 = int_to_ptr.vmem [resolvable:$true] %s370
          %373 = dma.hbm_to_vmem [thread:$0]  %s369, 32, %s371, [#allocation6]
        $region20: #{tpu_custom_call.1} parent=11 // pred_fallthru
          _
        // Predicated region
        $region21: #{tpu_custom_call.1} parent=11 // pred_check
          %p374 = pneg %p118
        $region22: #{tpu_custom_call.1} parent=11 // pred_check_branch
          %376 = sbr.rel (%p374) target = $region24
        $region23: #{tpu_custom_call.1} parent=11 // pred_region
          %378 = vsyncadd [#allocation9], 0
          %s379 = sshll.u32 %s3, 4
          %s380 = int_to_ptr.hbm [resolvable:$true] %s379
          %s381 = sshll.u32 [#allocation8], 4
          %s382 = int_to_ptr.vmem [resolvable:$true] %s381
          %387 = dma.hbm_to_vmem [thread:$0]  %s380, 2048, %s382, [#allocation9], 64, 64, 4
        $region24: #{tpu_custom_call.1} parent=11 // pred_fallthru
          _
        // Predicated region
        $region25: #{tpu_custom_call.1} parent=11 // pred_check
          %p388 = pneg %p139
        $region26: #{tpu_custom_call.1} parent=11 // pred_check_branch
          %390 = sbr.rel (%p388) target = $region28
        $region27: #{tpu_custom_call.1} parent=11 // pred_region
          _
        $region28: #{tpu_custom_call.1} parent=11 // pred_fallthru
          _
        // Predicated region
        $region29: #{tpu_custom_call.1} parent=11 // pred_check
          %p391 = pneg %p160
        $region30: #{tpu_custom_call.1} parent=11 // pred_check_branch
          %393 = sbr.rel (%p391) target = $region32
        $region31: #{tpu_custom_call.1} parent=11 // pred_region
          %395 = vsyncadd [#allocation9], 0
          %s396 = sshll.u32 %s5, 4
          %s397 = int_to_ptr.hbm [resolvable:$true] %s396
          %s398 = sshll.u32 [#allocation10], 4
          %s399 = int_to_ptr.vmem [resolvable:$true] %s398
          %404 = dma.hbm_to_vmem [thread:$0]  %s397, 1024, %s399, [#allocation9], 64, 64, 4
        $region32: #{tpu_custom_call.1} parent=11 // pred_fallthru
          _
        // Predicated region
        $region33: #{tpu_custom_call.1} parent=11 // pred_check
          %p405 = pneg %p181
        $region34: #{tpu_custom_call.1} parent=11 // pred_check_branch
          %407 = sbr.rel (%p405) target = $region36
        $region35: #{tpu_custom_call.1} parent=11 // pred_region
          _
        $region36: #{tpu_custom_call.1} parent=11 // pred_fallthru
          _
        // Predicated region
        $region37: #{tpu_custom_call.1} parent=11 // pred_check
          %p408 = pneg %p202
        $region38: #{tpu_custom_call.1} parent=11 // pred_check_branch
          %410 = sbr.rel (%p408) target = $region40
        $region39: #{tpu_custom_call.1} parent=11 // pred_region
          %412 = vsyncadd [#allocation12], 0
          %s413 = sshll.u32 %s7, 4
          %s414 = int_to_ptr.hbm [resolvable:$true] %s413
          %s415 = sshll.u32 [#allocation11], 4
          %s416 = int_to_ptr.vmem [resolvable:$true] %s415
          %421 = dma.hbm_to_vmem [thread:$0]  %s414, 128, %s416, [#allocation12], 64, 64, 4
        $region40: #{tpu_custom_call.1} parent=11 // pred_fallthru
          _
        // Predicated region
        $region41: #{tpu_custom_call.1} parent=11 // pred_check
          %p422 = pneg %p223
        $region42: #{tpu_custom_call.1} parent=11 // pred_check_branch
          %424 = sbr.rel (%p422) target = $region44
        $region43: #{tpu_custom_call.1} parent=11 // pred_region
          _
        $region44: #{tpu_custom_call.1} parent=11 // pred_fallthru
          _
        // Predicated region
        $region45: #{tpu_custom_call.1} parent=11 // pred_check
          %p425 = pneg %p244
        $region46: #{tpu_custom_call.1} parent=11 // pred_check_branch
          %427 = sbr.rel (%p425) target = $region48
        $region47: #{tpu_custom_call.1} parent=11 // pred_region
          %429 = vsyncadd [#allocation12], 0
          %s430 = sshll.u32 %s9, 4
          %s431 = int_to_ptr.hbm [resolvable:$true] %s430
          %s432 = sshll.u32 [#allocation13], 4
          %s433 = int_to_ptr.vmem [resolvable:$true] %s432
          %438 = dma.hbm_to_vmem [thread:$0]  %s431, 2048, %s433, [#allocation12], 128, 128, 8
        $region48: #{tpu_custom_call.1} parent=11 // pred_fallthru
          _
        // Predicated region
        $region49: #{tpu_custom_call.1} parent=11 // pred_check
          %p439 = pneg %p265
        $region50: #{tpu_custom_call.1} parent=11 // pred_check_branch
          %441 = sbr.rel (%p439) target = $region52
        $region51: #{tpu_custom_call.1} parent=11 // pred_region
          _
        $region52: #{tpu_custom_call.1} parent=11 // pred_fallthru
          _
        // Predicated region
        $region53: #{tpu_custom_call.1} parent=11 // pred_check
          %p442 = pneg %p286
        $region54: #{tpu_custom_call.1} parent=11 // pred_check_branch
          %444 = sbr.rel (%p442) target = $region56
        $region55: #{tpu_custom_call.1} parent=11 // pred_region
          %446 = vsyncadd [#allocation15], 0
          %s447 = sshll.u32 %s11, 4
          %s448 = int_to_ptr.hbm [resolvable:$true] %s447
          %s449 = sshll.u32 [#allocation14], 4
          %s450 = int_to_ptr.vmem [resolvable:$true] %s449
          %455 = dma.hbm_to_vmem [thread:$0]  %s448, 2048, %s450, [#allocation15], 64, 64, 4
        $region56: #{tpu_custom_call.1} parent=11 // pred_fallthru
          _
        // Predicated region
        $region57: #{tpu_custom_call.1} parent=11 // pred_check
          %p456 = pneg %p307
        $region58: #{tpu_custom_call.1} parent=11 // pred_check_branch
          %458 = sbr.rel (%p456) target = $region60
        $region59: #{tpu_custom_call.1} parent=11 // pred_region
          _
        $region60: #{tpu_custom_call.1} parent=11 // pred_fallthru
          _
      $region12: #{tpu_custom_call.1} parent=5 // pred_fallthru
        _
      %p459 = scmp.lt.s32.totalorder %s29, 2
      // Predicated region
      $region61: #{tpu_custom_call.1} parent=5 // pred_check
        %p460 = pneg %p459
      $region62: #{tpu_custom_call.1} parent=5 // pred_check_branch
        %462 = sbr.rel (%p460) target = $region64
      $region63: #{tpu_custom_call.1} parent=5 // pred_region
        // Predicated region
        $region65: #{tpu_custom_call.1} parent=63 // pred_check
          %p463 = pneg %p49
        $region66: #{tpu_custom_call.1} parent=63 // pred_check_branch
          %465 = sbr.rel (%p463) target = $region68
        $region67: #{tpu_custom_call.1} parent=63 // pred_region
          %s466 = sand.u32 %s39, 1
          %s467 = scalar_lea.sflag [#allocation3], %s466
          %s468 = sand.u32 %s39, 1
          %s469 = smul.addr %s468, 128
          %s470 = scalar_lea.vmem [#allocation2], %s469
          %s471 = smul.u32 16, %s29
          %473 = vsyncadd %s467, 0
          %s474 = smul.addr %s471, 8
          %s475 = scalar_lea.hbm %s0, %s474
          %s476 = sshll.u32 %s475, 4
          %s477 = int_to_ptr.hbm [resolvable:$true] %s476
          %s478 = sshll.u32 %s470, 4
          %s479 = int_to_ptr.vmem [resolvable:$true] %s478
          %484 = dma.hbm_to_vmem [thread:$0]  %s477, 2048, %s479, %s467, 128, 128, 8
        $region68: #{tpu_custom_call.1} parent=63 // pred_fallthru
          _
      $region64: #{tpu_custom_call.1} parent=5 // pred_fallthru
        _
      %p485 = scmp.le.s32.totalorder 1, %s29
      %p486 = scmp.lt.s32.totalorder %s29, 3
      %p487 = pnand %p485, %p486
      %p488 = pneg %p487
      // Predicated region
      $region69: #{tpu_custom_call.1} parent=5 // pred_check
        _
      $region70: #{tpu_custom_call.1} parent=5 // pred_check_branch
        %490 = sbr.rel (%p487) target = $region72
      $region71: #{tpu_custom_call.1} parent=5 // pred_region
        %s491 = ssub.s32 %s29, 1
        %s492 = sand.u32 %s42, 1
        %s493 = scalar_lea.sflag [#allocation3], %s492
        %s494 = sand.u32 %s42, 1
        %s495 = smul.addr %s494, 128
        %s496 = scalar_lea.vmem [#allocation2], %s495
        // Predicated region
        $region73: #{tpu_custom_call.1} parent=71 // pred_check
          %p497 = pneg %p55
        $region74: #{tpu_custom_call.1} parent=71 // pred_check_branch
          %499 = sbr.rel (%p497) target = $region76
        $region75: #{tpu_custom_call.1} parent=71 // pred_region
          %501 = dma.done %s493, 2048
        $region76: #{tpu_custom_call.1} parent=71 // pred_fallthru
          _
        // Predicated region
        $region77: #{tpu_custom_call.1} parent=71 // pred_check
          %p502 = pneg %p76
        $region78: #{tpu_custom_call.1} parent=71 // pred_check_branch
          %504 = sbr.rel (%p502) target = $region80
        $region79: #{tpu_custom_call.1} parent=71 // pred_region
          %506 = dma.done [#allocation6], 2048
        $region80: #{tpu_custom_call.1} parent=71 // pred_fallthru
          _
        // Predicated region
        $region81: #{tpu_custom_call.1} parent=71 // pred_check
          %p507 = pneg %p97
        $region82: #{tpu_custom_call.1} parent=71 // pred_check_branch
          %509 = sbr.rel (%p507) target = $region84
        $region83: #{tpu_custom_call.1} parent=71 // pred_region
          %511 = dma.done [#allocation6], 32
        $region84: #{tpu_custom_call.1} parent=71 // pred_fallthru
          _
        // Predicated region
        $region85: #{tpu_custom_call.1} parent=71 // pred_check
          %p512 = pneg %p118
        $region86: #{tpu_custom_call.1} parent=71 // pred_check_branch
          %514 = sbr.rel (%p512) target = $region88
        $region87: #{tpu_custom_call.1} parent=71 // pred_region
          %516 = dma.done [#allocation9], 2048
        $region88: #{tpu_custom_call.1} parent=71 // pred_fallthru
          _
        // Predicated region
        $region89: #{tpu_custom_call.1} parent=71 // pred_check
          %p517 = pneg %p160
        $region90: #{tpu_custom_call.1} parent=71 // pred_check_branch
          %519 = sbr.rel (%p517) target = $region92
        $region91: #{tpu_custom_call.1} parent=71 // pred_region
          %521 = dma.done [#allocation9], 1024
        $region92: #{tpu_custom_call.1} parent=71 // pred_fallthru
          _
        // Predicated region
        $region93: #{tpu_custom_call.1} parent=71 // pred_check
          %p522 = pneg %p202
        $region94: #{tpu_custom_call.1} parent=71 // pred_check_branch
          %524 = sbr.rel (%p522) target = $region96
        $region95: #{tpu_custom_call.1} parent=71 // pred_region
          %526 = dma.done [#allocation12], 128
        $region96: #{tpu_custom_call.1} parent=71 // pred_fallthru
          _
        // Predicated region
        $region97: #{tpu_custom_call.1} parent=71 // pred_check
          %p527 = pneg %p244
        $region98: #{tpu_custom_call.1} parent=71 // pred_check_branch
          %529 = sbr.rel (%p527) target = $region100
        $region99: #{tpu_custom_call.1} parent=71 // pred_region
          %531 = dma.done [#allocation12], 2048
        $region100: #{tpu_custom_call.1} parent=71 // pred_fallthru
          _
        // Predicated region
        $region101: #{tpu_custom_call.1} parent=71 // pred_check
          %p532 = pneg %p286
        $region102: #{tpu_custom_call.1} parent=71 // pred_check_branch
          %534 = sbr.rel (%p532) target = $region104
        $region103: #{tpu_custom_call.1} parent=71 // pred_region
          %536 = dma.done [#allocation15], 2048
        $region104: #{tpu_custom_call.1} parent=71 // pred_fallthru
          _
        %s537 = sand.u32 %s42, 1
        %s538 = scalar_lea.sflag [#allocation3], %s537
        %s539 = sand.u32 %s42, 1
        %s540 = smul.addr %s539, 128
        %s541 = scalar_lea.vmem [#allocation2], %s540
        %p542 = pneg %p55
        %p543 = pneg %p52
        %p544 = pneg %p76
        %p545 = pneg %p73
        %p546 = pneg %p97
        %p547 = pneg %p94
        %p548 = pneg %p118
        %p549 = pneg %p115
        %p550 = pneg %p139
        %p551 = pneg %p136
        %p552 = pneg %p160
        %p553 = pneg %p157
        %p554 = pneg %p181
        %p555 = pneg %p178
        %p556 = pneg %p202
        %p557 = pneg %p199
        %p558 = pneg %p223
        %p559 = pneg %p220
        %p560 = pneg %p244
        %p561 = pneg %p241
        %p562 = pneg %p265
        %p563 = pneg %p262
        %p564 = pneg %p286
        %p565 = pneg %p283
        %p566 = pneg %p307
        %p567 = pneg %p304
        %p568 = pneg %p333
        %p569 = pneg %p330
        %s570 = sand.u32 %s320, 1
        %s571 = scalar_lea.sflag [#allocation4], %s570
        %s572 = sand.u32 %s320, 1
        %s573 = smul.addr %s572, 128
        %s574 = scalar_lea.vmem [#allocation16], %s573
        %s575 = smul.u32 16, %s34
        %s576 = smul.u32 16, %s34
        %v578 = vld [vmem:[%s496] sm:$0xff]
        %v579 = vld [vmem:[%s496 + $0x8] sm:$0xff]
        %v580 = vld [vmem:[%s496 + $0x10] sm:$0xff]
        %v581 = vld [vmem:[%s496 + $0x18] sm:$0xff]
        %v582 = vld [vmem:[%s496 + $0x20] sm:$0xff]
        %v583 = vld [vmem:[%s496 + $0x28] sm:$0xff]
        %v584 = vld [vmem:[%s496 + $0x30] sm:$0xff]
        %v585 = vld [vmem:[%s496 + $0x38] sm:$0xff]
        %v586 = vld [vmem:[%s496 + $0x40] sm:$0xff]
        %v587 = vld [vmem:[%s496 + $0x48] sm:$0xff]
        %v588 = vld [vmem:[%s496 + $0x50] sm:$0xff]
        %v589 = vld [vmem:[%s496 + $0x58] sm:$0xff]
        %v590 = vld [vmem:[%s496 + $0x60] sm:$0xff]
        %v591 = vld [vmem:[%s496 + $0x68] sm:$0xff]
        %v592 = vld [vmem:[%s496 + $0x70] sm:$0xff]
        %v593 = vld [vmem:[%s496 + $0x78] sm:$0xff]
        %v594 = vpack.c.bf16 %v579, %v578
        %v595 = vpack.c.bf16 %v581, %v580
        %v596 = vpack.c.bf16 %v583, %v582
        %v597 = vpack.c.bf16 %v585, %v584
        %v598 = vpack.c.bf16 %v587, %v586
        %v599 = vpack.c.bf16 %v589, %v588
        %v600 = vpack.c.bf16 %v591, %v590
        %v601 = vpack.c.bf16 %v593, %v592
        %v602 = vld [vmem:[#allocation5] sm:$0xff]
        %v603 = vld [vmem:[#allocation5 + $0x8] sm:$0xff]
        %v604 = vld [vmem:[#allocation5 + $0x10] sm:$0xff]
        %v605 = vld [vmem:[#allocation5 + $0x18] sm:$0xff]
        %v606 = vld [vmem:[#allocation5 + $0x20] sm:$0xff]
        %v607 = vld [vmem:[#allocation5 + $0x28] sm:$0xff]
        %v608 = vld [vmem:[#allocation5 + $0x30] sm:$0xff]
        %v609 = vld [vmem:[#allocation5 + $0x38] sm:$0xff]
        %v610 = vld [vmem:[#allocation5 + $0x40] sm:$0xff]
        %v611 = vld [vmem:[#allocation5 + $0x48] sm:$0xff]
        %v612 = vld [vmem:[#allocation5 + $0x50] sm:$0xff]
        %v613 = vld [vmem:[#allocation5 + $0x58] sm:$0xff]
        %v614 = vld [vmem:[#allocation5 + $0x60] sm:$0xff]
        %v615 = vld [vmem:[#allocation5 + $0x68] sm:$0xff]
        %v616 = vld [vmem:[#allocation5 + $0x70] sm:$0xff]
        %v617 = vld [vmem:[#allocation5 + $0x78] sm:$0xff]
        %v618 = vld [vmem:[#allocation7] sm:$0x3]
        %v620 = vperm.slane %v618, 0
        %v621 = vperm.slane %v618, 1
        %v640 = vunpack.c.l.b16 %v602
        %v641 = vunpack.c.h.b16 %v602
        %v642 = vunpack.c.l.b16 %v603
        %v643 = vunpack.c.h.b16 %v603
        %v644 = vunpack.c.l.b16 %v604
        %v645 = vunpack.c.h.b16 %v604
        %v646 = vunpack.c.l.b16 %v605
        %v647 = vunpack.c.h.b16 %v605
        %v648 = vunpack.c.l.b16 %v606
        %v649 = vunpack.c.h.b16 %v606
        %v650 = vunpack.c.l.b16 %v607
        %v651 = vunpack.c.h.b16 %v607
        %v652 = vunpack.c.l.b16 %v608
        %v653 = vunpack.c.h.b16 %v608
        %v654 = vunpack.c.l.b16 %v609
        %v655 = vunpack.c.h.b16 %v609
        %v656 = vunpack.c.l.b16 %v610
        %v657 = vunpack.c.h.b16 %v610
        %v658 = vunpack.c.l.b16 %v611
        %v659 = vunpack.c.h.b16 %v611
        %v660 = vunpack.c.l.b16 %v612
        %v661 = vunpack.c.h.b16 %v612
        %v662 = vunpack.c.l.b16 %v613
        %v663 = vunpack.c.h.b16 %v613
        %v664 = vunpack.c.l.b16 %v614
        %v665 = vunpack.c.h.b16 %v614
        %v666 = vunpack.c.l.b16 %v615
        %v667 = vunpack.c.h.b16 %v615
        %v668 = vunpack.c.l.b16 %v616
        %v669 = vunpack.c.h.b16 %v616
        %v670 = vunpack.c.l.b16 %v617
        %v671 = vunpack.c.h.b16 %v617
        %v672 = vpack.c.b16 %v642, %v640
        %v673 = vpack.c.b16 %v643, %v641
        %v674 = vpack.c.b16 %v646, %v644
        %v675 = vpack.c.b16 %v647, %v645
        %v676 = vpack.c.b16 %v650, %v648
        %v677 = vpack.c.b16 %v651, %v649
        %v678 = vpack.c.b16 %v654, %v652
        %v679 = vpack.c.b16 %v655, %v653
        %v680 = vpack.c.b16 %v658, %v656
        %v681 = vpack.c.b16 %v659, %v657
        %v682 = vpack.c.b16 %v662, %v660
        %v683 = vpack.c.b16 %v663, %v661
        %v684 = vpack.c.b16 %v666, %v664
        %v685 = vpack.c.b16 %v667, %v665
        %v686 = vpack.c.b16 %v670, %v668
        %v687 = vpack.c.b16 %v671, %v669
        %704 = vmatpush.bf16.msra.mxu0 %v686
        %705 = vmatpush.bf16.msra.mxu0 %v684
        %706 = vmatpush.bf16.msra.mxu0 %v682
        %707 = vmatpush.bf16.msra.mxu0 %v680
        %708 = vmatpush.bf16.msra.mxu0 %v678
        %709 = vmatpush.bf16.msra.mxu0 %v676
        %710 = vmatpush.bf16.msra.mxu0 %v674
        %711 = vmatpush.bf16.msra.mxu0 %v672
        %712 = vmatmul.bf16.gmra.mxu0 %v594
        %v713 = vpop.f32.mrf.mxu0
        %v714 = vadd.f32 %v620, %v713
        %v715 = vpop.f32.mrf.mxu0
        %v716 = vadd.f32 %v620, %v715
        %717 = vmatmul.bf16.gmra.mxu0 %v595
        %v718 = vpop.f32.mrf.mxu0
        %v719 = vadd.f32 %v620, %v718
        %v720 = vpop.f32.mrf.mxu0
        %v721 = vadd.f32 %v620, %v720
        %722 = vmatmul.bf16.gmra.mxu0 %v596
        %v723 = vpop.f32.mrf.mxu0
        %v724 = vadd.f32 %v620, %v723
        %v725 = vpop.f32.mrf.mxu0
        %v726 = vadd.f32 %v620, %v725
        %727 = vmatmul.bf16.gmra.mxu0 %v597
        %v728 = vpop.f32.mrf.mxu0
        %v729 = vadd.f32 %v620, %v728
        %v730 = vpop.f32.mrf.mxu0
        %v731 = vadd.f32 %v620, %v730
        %732 = vmatmul.bf16.gmra.mxu0 %v598
        %v733 = vpop.f32.mrf.mxu0
        %v734 = vadd.f32 %v620, %v733
        %v735 = vpop.f32.mrf.mxu0
        %v736 = vadd.f32 %v620, %v735
        %737 = vmatmul.bf16.gmra.mxu0 %v599
        %v738 = vpop.f32.mrf.mxu0
        %v739 = vadd.f32 %v620, %v738
        %v740 = vpop.f32.mrf.mxu0
        %v741 = vadd.f32 %v620, %v740
        %742 = vmatmul.bf16.gmra.mxu0 %v600
        %v743 = vpop.f32.mrf.mxu0
        %v744 = vadd.f32 %v620, %v743
        %v745 = vpop.f32.mrf.mxu0
        %v746 = vadd.f32 %v620, %v745
        %747 = vmatmul.bf16.gmra.mxu0 %v601
        %v748 = vpop.f32.mrf.mxu0
        %v749 = vadd.f32 %v620, %v748
        %v750 = vpop.f32.mrf.mxu0
        %v751 = vadd.f32 %v620, %v750
        %752 = vdwg.mxu0
        %753 = vmatpush.bf16.msra.mxu0 %v687
        %754 = vmatpush.bf16.msra.mxu0 %v685
        %755 = vmatpush.bf16.msra.mxu0 %v683
        %756 = vmatpush.bf16.msra.mxu0 %v681
        %757 = vmatpush.bf16.msra.mxu0 %v679
        %758 = vmatpush.bf16.msra.mxu0 %v677
        %759 = vmatpush.bf16.msra.mxu0 %v675
        %760 = vmatpush.bf16.msra.mxu0 %v673
        %761 = vmatmul.bf16.gmra.mxu0 %v594
        %v762 = vpop.f32.mrf.mxu0
        %v763 = vadd.f32 %v621, %v762
        %v764 = vpop.f32.mrf.mxu0
        %v765 = vadd.f32 %v621, %v764
        %766 = vmatmul.bf16.gmra.mxu0 %v595
        %v767 = vpop.f32.mrf.mxu0
        %v768 = vadd.f32 %v621, %v767
        %v769 = vpop.f32.mrf.mxu0
        %v770 = vadd.f32 %v621, %v769
        %771 = vmatmul.bf16.gmra.mxu0 %v596
        %v772 = vpop.f32.mrf.mxu0
        %v773 = vadd.f32 %v621, %v772
        %v774 = vpop.f32.mrf.mxu0
        %v775 = vadd.f32 %v621, %v774
        %776 = vmatmul.bf16.gmra.mxu0 %v597
        %v777 = vpop.f32.mrf.mxu0
        %v778 = vadd.f32 %v621, %v777
        %v779 = vpop.f32.mrf.mxu0
        %v780 = vadd.f32 %v621, %v779
        %781 = vmatmul.bf16.gmra.mxu0 %v598
        %v782 = vpop.f32.mrf.mxu0
        %v783 = vadd.f32 %v621, %v782
        %v784 = vpop.f32.mrf.mxu0
        %v785 = vadd.f32 %v621, %v784
        %786 = vmatmul.bf16.gmra.mxu0 %v599
        %v787 = vpop.f32.mrf.mxu0
        %v788 = vadd.f32 %v621, %v787
        %v789 = vpop.f32.mrf.mxu0
        %v790 = vadd.f32 %v621, %v789
        %791 = vmatmul.bf16.gmra.mxu0 %v600
        %v792 = vpop.f32.mrf.mxu0
        %v793 = vadd.f32 %v621, %v792
        %v794 = vpop.f32.mrf.mxu0
        %v795 = vadd.f32 %v621, %v794
        %796 = vmatmul.bf16.gmra.mxu0 %v601
        %v797 = vpop.f32.mrf.mxu0
        %v798 = vadd.f32 %v621, %v797
        %v799 = vpop.f32.mrf.mxu0
        %v800 = vadd.f32 %v621, %v799
        %801 = vdwg.mxu0
        %v802 = vmax.f32 %v714, 0.0
        %v803 = vmax.f32 %v763, 0.0
        %v804 = vmax.f32 %v716, 0.0
        %v805 = vmax.f32 %v765, 0.0
        %v806 = vmax.f32 %v719, 0.0
        %v807 = vmax.f32 %v768, 0.0
        %v808 = vmax.f32 %v721, 0.0
        %v809 = vmax.f32 %v770, 0.0
        %v810 = vmax.f32 %v724, 0.0
        %v811 = vmax.f32 %v773, 0.0
        %v812 = vmax.f32 %v726, 0.0
        %v813 = vmax.f32 %v775, 0.0
        %v814 = vmax.f32 %v729, 0.0
        %v815 = vmax.f32 %v778, 0.0
        %v816 = vmax.f32 %v731, 0.0
        %v817 = vmax.f32 %v780, 0.0
        %v818 = vmax.f32 %v734, 0.0
        %v819 = vmax.f32 %v783, 0.0
        %v820 = vmax.f32 %v736, 0.0
        %v821 = vmax.f32 %v785, 0.0
        %v822 = vmax.f32 %v739, 0.0
        %v823 = vmax.f32 %v788, 0.0
        %v824 = vmax.f32 %v741, 0.0
        %v825 = vmax.f32 %v790, 0.0
        %v826 = vmax.f32 %v744, 0.0
        %v827 = vmax.f32 %v793, 0.0
        %v828 = vmax.f32 %v746, 0.0
        %v829 = vmax.f32 %v795, 0.0
        %v830 = vmax.f32 %v749, 0.0
        %v831 = vmax.f32 %v798, 0.0
        %v832 = vmax.f32 %v751, 0.0
        %v833 = vmax.f32 %v800, 0.0
        %v834 = vpack.c.bf16 %v804, %v802
        %v835 = vpack.c.bf16 %v805, %v803
        %v836 = vpack.c.bf16 %v808, %v806
        %v837 = vpack.c.bf16 %v809, %v807
        %v838 = vpack.c.bf16 %v812, %v810
        %v839 = vpack.c.bf16 %v813, %v811
        %v840 = vpack.c.bf16 %v816, %v814
        %v841 = vpack.c.bf16 %v817, %v815
        %v842 = vpack.c.bf16 %v820, %v818
        %v843 = vpack.c.bf16 %v821, %v819
        %v844 = vpack.c.bf16 %v824, %v822
        %v845 = vpack.c.bf16 %v825, %v823
        %v846 = vpack.c.bf16 %v828, %v826
        %v847 = vpack.c.bf16 %v829, %v827
        %v848 = vpack.c.bf16 %v832, %v830
        %v849 = vpack.c.bf16 %v833, %v831
        %v850 = vld [vmem:[#allocation8] sm:$0xf]
        %v851 = vld [vmem:[#allocation8 + $0x4] sm:$0xf]
        %v852 = vld [vmem:[#allocation8 + $0x8] sm:$0xf]
        %v853 = vld [vmem:[#allocation8 + $0xc] sm:$0xf]
        %v854 = vld [vmem:[#allocation8 + $0x10] sm:$0xf]
        %v855 = vld [vmem:[#allocation8 + $0x14] sm:$0xf]
        %v856 = vld [vmem:[#allocation8 + $0x18] sm:$0xf]
        %v857 = vld [vmem:[#allocation8 + $0x1c] sm:$0xf]
        %v858 = vld [vmem:[#allocation8 + $0x20] sm:$0xf]
        %v859 = vld [vmem:[#allocation8 + $0x24] sm:$0xf]
        %v860 = vld [vmem:[#allocation8 + $0x28] sm:$0xf]
        %v861 = vld [vmem:[#allocation8 + $0x2c] sm:$0xf]
        %v862 = vld [vmem:[#allocation8 + $0x30] sm:$0xf]
        %v863 = vld [vmem:[#allocation8 + $0x34] sm:$0xf]
        %v864 = vld [vmem:[#allocation8 + $0x38] sm:$0xf]
        %v865 = vld [vmem:[#allocation8 + $0x3c] sm:$0xf]
        %v866 = vld [vmem:[#allocation8 + $0x40] sm:$0xf]
        %v867 = vld [vmem:[#allocation8 + $0x44] sm:$0xf]
        %v868 = vld [vmem:[#allocation8 + $0x48] sm:$0xf]
        %v869 = vld [vmem:[#allocation8 + $0x4c] sm:$0xf]
        %v870 = vld [vmem:[#allocation8 + $0x50] sm:$0xf]
        %v871 = vld [vmem:[#allocation8 + $0x54] sm:$0xf]
        %v872 = vld [vmem:[#allocation8 + $0x58] sm:$0xf]
        %v873 = vld [vmem:[#allocation8 + $0x5c] sm:$0xf]
        %v874 = vld [vmem:[#allocation8 + $0x60] sm:$0xf]
        %v875 = vld [vmem:[#allocation8 + $0x64] sm:$0xf]
        %v876 = vld [vmem:[#allocation8 + $0x68] sm:$0xf]
        %v877 = vld [vmem:[#allocation8 + $0x6c] sm:$0xf]
        %v878 = vld [vmem:[#allocation8 + $0x70] sm:$0xf]
        %v879 = vld [vmem:[#allocation8 + $0x74] sm:$0xf]
        %v880 = vld [vmem:[#allocation8 + $0x78] sm:$0xf]
        %v881 = vld [vmem:[#allocation8 + $0x7c] sm:$0xf]
        %v882 = vld [vmem:[%s4] sm:$0x1]
        %v884 = vperm.slane %v882, 0
        %v918 = vunpack.c.l.b16 %v850
        %v919 = vunpack.c.l.b16 %v851
        %v920 = vunpack.c.l.b16 %v852
        %v921 = vunpack.c.l.b16 %v853
        %v922 = vunpack.c.l.b16 %v854
        %v923 = vunpack.c.l.b16 %v855
        %v924 = vunpack.c.l.b16 %v856
        %v925 = vunpack.c.l.b16 %v857
        %v926 = vunpack.c.l.b16 %v858
        %v927 = vunpack.c.l.b16 %v859
        %v928 = vunpack.c.l.b16 %v860
        %v929 = vunpack.c.l.b16 %v861
        %v930 = vunpack.c.l.b16 %v862
        %v931 = vunpack.c.l.b16 %v863
        %v932 = vunpack.c.l.b16 %v864
        %v933 = vunpack.c.l.b16 %v865
        %v934 = vunpack.c.l.b16 %v866
        %v935 = vunpack.c.l.b16 %v867
        %v936 = vunpack.c.l.b16 %v868
        %v937 = vunpack.c.l.b16 %v869
        %v938 = vunpack.c.l.b16 %v870
        %v939 = vunpack.c.l.b16 %v871
        %v940 = vunpack.c.l.b16 %v872
        %v941 = vunpack.c.l.b16 %v873
        %v942 = vunpack.c.l.b16 %v874
        %v943 = vunpack.c.l.b16 %v875
        %v944 = vunpack.c.l.b16 %v876
        %v945 = vunpack.c.l.b16 %v877
        %v946 = vunpack.c.l.b16 %v878
        %v947 = vunpack.c.l.b16 %v879
        %v948 = vunpack.c.l.b16 %v880
        %v949 = vunpack.c.l.b16 %v881
        %v950 = vpack.c.b16 %v919, %v918
        %v951 = vpack.c.b16 %v921, %v920
        %v952 = vpack.c.b16 %v923, %v922
        %v953 = vpack.c.b16 %v925, %v924
        %v954 = vpack.c.b16 %v927, %v926
        %v955 = vpack.c.b16 %v929, %v928
        %v956 = vpack.c.b16 %v931, %v930
        %v957 = vpack.c.b16 %v933, %v932
        %v958 = vpack.c.b16 %v935, %v934
        %v959 = vpack.c.b16 %v937, %v936
        %v960 = vpack.c.b16 %v939, %v938
        %v961 = vpack.c.b16 %v941, %v940
        %v962 = vpack.c.b16 %v943, %v942
        %v963 = vpack.c.b16 %v945, %v944
        %v964 = vpack.c.b16 %v947, %v946
        %v965 = vpack.c.b16 %v949, %v948
        %982 = vmatpush.bf16.msra.mxu0 %v957
        %983 = vmatpush.bf16.msra.mxu0 %v956
        %984 = vmatpush.bf16.msra.mxu0 %v955
        %985 = vmatpush.bf16.msra.mxu0 %v954
        %986 = vmatpush.bf16.msra.mxu0 %v953
        %987 = vmatpush.bf16.msra.mxu0 %v952
        %988 = vmatpush.bf16.msra.mxu0 %v951
        %989 = vmatpush.bf16.msra.mxu0 %v950
        %990 = vmatmul.bf16.gmra.mxu0 %v834
        %v991 = vpop.f32.mrf.mxu0
        %v992 = vadd.f32 %v884, %v991
        %v993 = vpop.f32.mrf.mxu0
        %v994 = vadd.f32 %v884, %v993
        %995 = vmatmul.bf16.gmra.mxu0 %v836
        %v996 = vpop.f32.mrf.mxu0
        %v997 = vadd.f32 %v884, %v996
        %v998 = vpop.f32.mrf.mxu0
        %v999 = vadd.f32 %v884, %v998
        %1000 = vmatmul.bf16.gmra.mxu0 %v838
        %v1001 = vpop.f32.mrf.mxu0
        %v1002 = vadd.f32 %v884, %v1001
        %v1003 = vpop.f32.mrf.mxu0
        %v1004 = vadd.f32 %v884, %v1003
        %1005 = vmatmul.bf16.gmra.mxu0 %v840
        %v1006 = vpop.f32.mrf.mxu0
        %v1007 = vadd.f32 %v884, %v1006
        %v1008 = vpop.f32.mrf.mxu0
        %v1009 = vadd.f32 %v884, %v1008
        %1010 = vmatmul.bf16.gmra.mxu0 %v842
        %v1011 = vpop.f32.mrf.mxu0
        %v1012 = vadd.f32 %v884, %v1011
        %v1013 = vpop.f32.mrf.mxu0
        %v1014 = vadd.f32 %v884, %v1013
        %1015 = vmatmul.bf16.gmra.mxu0 %v844
        %v1016 = vpop.f32.mrf.mxu0
        %v1017 = vadd.f32 %v884, %v1016
        %v1018 = vpop.f32.mrf.mxu0
        %v1019 = vadd.f32 %v884, %v1018
        %1020 = vmatmul.bf16.gmra.mxu0 %v846
        %v1021 = vpop.f32.mrf.mxu0
        %v1022 = vadd.f32 %v884, %v1021
        %v1023 = vpop.f32.mrf.mxu0
        %v1024 = vadd.f32 %v884, %v1023
        %1025 = vmatmul.bf16.gmra.mxu0 %v848
        %v1026 = vpop.f32.mrf.mxu0
        %v1027 = vadd.f32 %v884, %v1026
        %v1028 = vpop.f32.mrf.mxu0
        %v1029 = vadd.f32 %v884, %v1028
        %1030 = vdwg.mxu0
        %1031 = vmatpush.bf16.msra.mxu0 %v965
        %1032 = vmatpush.bf16.msra.mxu0 %v964
        %1033 = vmatpush.bf16.msra.mxu0 %v963
        %1034 = vmatpush.bf16.msra.mxu0 %v962
        %1035 = vmatpush.bf16.msra.mxu0 %v961
        %1036 = vmatpush.bf16.msra.mxu0 %v960
        %1037 = vmatpush.bf16.msra.mxu0 %v959
        %1038 = vmatpush.bf16.msra.mxu0 %v958
        %1039 = vmatmul.bf16.gmra.mxu0 %v835
        %v1040 = vpop.f32.mrf.mxu0
        %v1041 = vadd.f32 %v992, %v1040
        %v1042 = vpop.f32.mrf.mxu0
        %v1043 = vadd.f32 %v994, %v1042
        %1044 = vmatmul.bf16.gmra.mxu0 %v837
        %v1045 = vpop.f32.mrf.mxu0
        %v1046 = vadd.f32 %v997, %v1045
        %v1047 = vpop.f32.mrf.mxu0
        %v1048 = vadd.f32 %v999, %v1047
        %1049 = vmatmul.bf16.gmra.mxu0 %v839
        %v1050 = vpop.f32.mrf.mxu0
        %v1051 = vadd.f32 %v1002, %v1050
        %v1052 = vpop.f32.mrf.mxu0
        %v1053 = vadd.f32 %v1004, %v1052
        %1054 = vmatmul.bf16.gmra.mxu0 %v841
        %v1055 = vpop.f32.mrf.mxu0
        %v1056 = vadd.f32 %v1007, %v1055
        %v1057 = vpop.f32.mrf.mxu0
        %v1058 = vadd.f32 %v1009, %v1057
        %1059 = vmatmul.bf16.gmra.mxu0 %v843
        %v1060 = vpop.f32.mrf.mxu0
        %v1061 = vadd.f32 %v1012, %v1060
        %v1062 = vpop.f32.mrf.mxu0
        %v1063 = vadd.f32 %v1014, %v1062
        %1064 = vmatmul.bf16.gmra.mxu0 %v845
        %v1065 = vpop.f32.mrf.mxu0
        %v1066 = vadd.f32 %v1017, %v1065
        %v1067 = vpop.f32.mrf.mxu0
        %v1068 = vadd.f32 %v1019, %v1067
        %1069 = vmatmul.bf16.gmra.mxu0 %v847
        %v1070 = vpop.f32.mrf.mxu0
        %v1071 = vadd.f32 %v1022, %v1070
        %v1072 = vpop.f32.mrf.mxu0
        %v1073 = vadd.f32 %v1024, %v1072
        %1074 = vmatmul.bf16.gmra.mxu0 %v849
        %v1075 = vpop.f32.mrf.mxu0
        %v1076 = vadd.f32 %v1027, %v1075
        %v1077 = vpop.f32.mrf.mxu0
        %v1078 = vadd.f32 %v1029, %v1077
        %1079 = vdwg.mxu0
        %v1080 = vmax.f32 %v1041, 0.0
        %v1081 = vmax.f32 %v1043, 0.0
        %v1082 = vmax.f32 %v1046, 0.0
        %v1083 = vmax.f32 %v1048, 0.0
        %v1084 = vmax.f32 %v1051, 0.0
        %v1085 = vmax.f32 %v1053, 0.0
        %v1086 = vmax.f32 %v1056, 0.0
        %v1087 = vmax.f32 %v1058, 0.0
        %v1088 = vmax.f32 %v1061, 0.0
        %v1089 = vmax.f32 %v1063, 0.0
        %v1090 = vmax.f32 %v1066, 0.0
        %v1091 = vmax.f32 %v1068, 0.0
        %v1092 = vmax.f32 %v1071, 0.0
        %v1093 = vmax.f32 %v1073, 0.0
        %v1094 = vmax.f32 %v1076, 0.0
        %v1095 = vmax.f32 %v1078, 0.0
        %v1096 = vpack.c.bf16 %v1081, %v1080
        %v1097 = vpack.c.bf16 %v1083, %v1082
        %v1098 = vpack.c.bf16 %v1085, %v1084
        %v1099 = vpack.c.bf16 %v1087, %v1086
        %v1100 = vpack.c.bf16 %v1089, %v1088
        %v1101 = vpack.c.bf16 %v1091, %v1090
        %v1102 = vpack.c.bf16 %v1093, %v1092
        %v1103 = vpack.c.bf16 %v1095, %v1094
        %v1104 = vld [vmem:[#allocation10] sm:$0xf]
        %v1105 = vld [vmem:[#allocation10 + $0x4] sm:$0xf]
        %v1106 = vld [vmem:[#allocation10 + $0x8] sm:$0xf]
        %v1107 = vld [vmem:[#allocation10 + $0xc] sm:$0xf]
        %v1108 = vld [vmem:[#allocation10 + $0x10] sm:$0xf]
        %v1109 = vld [vmem:[#allocation10 + $0x14] sm:$0xf]
        %v1110 = vld [vmem:[#allocation10 + $0x18] sm:$0xf]
        %v1111 = vld [vmem:[#allocation10 + $0x1c] sm:$0xf]
        %v1112 = vld [vmem:[#allocation10 + $0x20] sm:$0xf]
        %v1113 = vld [vmem:[#allocation10 + $0x24] sm:$0xf]
        %v1114 = vld [vmem:[#allocation10 + $0x28] sm:$0xf]
        %v1115 = vld [vmem:[#allocation10 + $0x2c] sm:$0xf]
        %v1116 = vld [vmem:[#allocation10 + $0x30] sm:$0xf]
        %v1117 = vld [vmem:[#allocation10 + $0x34] sm:$0xf]
        %v1118 = vld [vmem:[#allocation10 + $0x38] sm:$0xf]
        %v1119 = vld [vmem:[#allocation10 + $0x3c] sm:$0xf]
        %v1120 = vld [vmem:[%s6] sm:$0x1]
        %v1122 = vperm.slane %v1120, 0
        %v1140 = vunpack.c.l.b16 %v1104
        %v1141 = vunpack.c.l.b16 %v1105
        %v1142 = vunpack.c.l.b16 %v1106
        %v1143 = vunpack.c.l.b16 %v1107
        %v1144 = vunpack.c.l.b16 %v1108
        %v1145 = vunpack.c.l.b16 %v1109
        %v1146 = vunpack.c.l.b16 %v1110
        %v1147 = vunpack.c.l.b16 %v1111
        %v1148 = vunpack.c.l.b16 %v1112
        %v1149 = vunpack.c.l.b16 %v1113
        %v1150 = vunpack.c.l.b16 %v1114
        %v1151 = vunpack.c.l.b16 %v1115
        %v1152 = vunpack.c.l.b16 %v1116
        %v1153 = vunpack.c.l.b16 %v1117
        %v1154 = vunpack.c.l.b16 %v1118
        %v1155 = vunpack.c.l.b16 %v1119
        %v1156 = vpack.c.b16 %v1141, %v1140
        %v1157 = vpack.c.b16 %v1143, %v1142
        %v1158 = vpack.c.b16 %v1145, %v1144
        %v1159 = vpack.c.b16 %v1147, %v1146
        %v1160 = vpack.c.b16 %v1149, %v1148
        %v1161 = vpack.c.b16 %v1151, %v1150
        %v1162 = vpack.c.b16 %v1153, %v1152
        %v1163 = vpack.c.b16 %v1155, %v1154
        %1172 = vmatpush.bf16.msra.mxu0 %v1163
        %1173 = vmatpush.bf16.msra.mxu0 %v1162
        %1174 = vmatpush.bf16.msra.mxu0 %v1161
        %1175 = vmatpush.bf16.msra.mxu0 %v1160
        %1176 = vmatpush.bf16.msra.mxu0 %v1159
        %1177 = vmatpush.bf16.msra.mxu0 %v1158
        %1178 = vmatpush.bf16.msra.mxu0 %v1157
        %1179 = vmatpush.bf16.msra.mxu0 %v1156
        %1180 = vmatmul.bf16.gmra.mxu0 %v1096
        %v1181 = vpop.f32.mrf.mxu0
        %v1182 = vadd.f32 %v1122, %v1181
        %v1183 = vpop.f32.mrf.mxu0
        %v1184 = vadd.f32 %v1122, %v1183
        %1185 = vmatmul.bf16.gmra.mxu0 %v1097
        %v1186 = vpop.f32.mrf.mxu0
        %v1187 = vadd.f32 %v1122, %v1186
        %v1188 = vpop.f32.mrf.mxu0
        %v1189 = vadd.f32 %v1122, %v1188
        %1190 = vmatmul.bf16.gmra.mxu0 %v1098
        %v1191 = vpop.f32.mrf.mxu0
        %v1192 = vadd.f32 %v1122, %v1191
        %v1193 = vpop.f32.mrf.mxu0
        %v1194 = vadd.f32 %v1122, %v1193
        %1195 = vmatmul.bf16.gmra.mxu0 %v1099
        %v1196 = vpop.f32.mrf.mxu0
        %v1197 = vadd.f32 %v1122, %v1196
        %v1198 = vpop.f32.mrf.mxu0
        %v1199 = vadd.f32 %v1122, %v1198
        %1200 = vmatmul.bf16.gmra.mxu0 %v1100
        %v1201 = vpop.f32.mrf.mxu0
        %v1202 = vadd.f32 %v1122, %v1201
        %v1203 = vpop.f32.mrf.mxu0
        %v1204 = vadd.f32 %v1122, %v1203
        %1205 = vmatmul.bf16.gmra.mxu0 %v1101
        %v1206 = vpop.f32.mrf.mxu0
        %v1207 = vadd.f32 %v1122, %v1206
        %v1208 = vpop.f32.mrf.mxu0
        %v1209 = vadd.f32 %v1122, %v1208
        %1210 = vmatmul.bf16.gmra.mxu0 %v1102
        %v1211 = vpop.f32.mrf.mxu0
        %v1212 = vadd.f32 %v1122, %v1211
        %v1213 = vpop.f32.mrf.mxu0
        %v1214 = vadd.f32 %v1122, %v1213
        %1215 = vmatmul.bf16.gmra.mxu0 %v1103
        %v1216 = vpop.f32.mrf.mxu0
        %v1217 = vadd.f32 %v1122, %v1216
        %v1218 = vpop.f32.mrf.mxu0
        %v1219 = vadd.f32 %v1122, %v1218
        %1220 = vdwg.mxu0
        %v1221 = vmul.f32 %v1182, 0.5
        %v1222 = vmul.f32 %v1184, 0.5
        %v1223 = vmul.f32 %v1187, 0.5
        %v1224 = vmul.f32 %v1189, 0.5
        %v1225 = vmul.f32 %v1192, 0.5
        %v1226 = vmul.f32 %v1194, 0.5
        %v1227 = vmul.f32 %v1197, 0.5
        %v1228 = vmul.f32 %v1199, 0.5
        %v1229 = vmul.f32 %v1202, 0.5
        %v1230 = vmul.f32 %v1204, 0.5
        %v1231 = vmul.f32 %v1207, 0.5
        %v1232 = vmul.f32 %v1209, 0.5
        %v1233 = vmul.f32 %v1212, 0.5
        %v1234 = vmul.f32 %v1214, 0.5
        %v1235 = vmul.f32 %v1217, 0.5
        %v1236 = vmul.f32 %v1219, 0.5
        %v1237 = vmul.f32 %v1221, 1.442695
        %v1238 = vpow.pop %v1237
        %v1239 = vmul.f32 %v1222, 1.442695
        %v1240 = vpow.pop %v1239
        %v1241 = vmul.f32 %v1223, 1.442695
        %v1242 = vpow.pop %v1241
        %v1243 = vmul.f32 %v1224, 1.442695
        %v1244 = vpow.pop %v1243
        %v1245 = vmul.f32 %v1225, 1.442695
        %v1246 = vpow.pop %v1245
        %v1247 = vmul.f32 %v1226, 1.442695
        %v1248 = vpow.pop %v1247
        %v1249 = vmul.f32 %v1227, 1.442695
        %v1250 = vpow.pop %v1249
        %v1251 = vmul.f32 %v1228, 1.442695
        %v1252 = vpow.pop %v1251
        %v1253 = vmul.f32 %v1229, 1.442695
        %v1254 = vpow.pop %v1253
        %v1255 = vmul.f32 %v1230, 1.442695
        %v1256 = vpow.pop %v1255
        %v1257 = vmul.f32 %v1231, 1.442695
        %v1258 = vpow.pop %v1257
        %v1259 = vmul.f32 %v1232, 1.442695
        %v1260 = vpow.pop %v1259
        %v1261 = vmul.f32 %v1233, 1.442695
        %v1262 = vpow.pop %v1261
        %v1263 = vmul.f32 %v1234, 1.442695
        %v1264 = vpow.pop %v1263
        %v1265 = vmul.f32 %v1235, 1.442695
        %v1266 = vpow.pop %v1265
        %v1267 = vmul.f32 %v1236, 1.442695
        %v1268 = vpow.pop %v1267
        %1285 = vrot.lane.b32.xlu0 %v1238, 112
        %v1286 = vpop.permute.xlu0 %1285
        %1287 = vrot.lane.b32.xlu0 %v1240, 112
        %v1288 = vpop.permute.xlu0 %1287
        %1289 = vrot.lane.b32.xlu0 %v1242, 112
        %v1290 = vpop.permute.xlu0 %1289
        %1291 = vrot.lane.b32.xlu0 %v1244, 112
        %v1292 = vpop.permute.xlu0 %1291
        %1293 = vrot.lane.b32.xlu0 %v1246, 112
        %v1294 = vpop.permute.xlu0 %1293
        %1295 = vrot.lane.b32.xlu0 %v1248, 112
        %v1296 = vpop.permute.xlu0 %1295
        %1297 = vrot.lane.b32.xlu0 %v1250, 112
        %v1298 = vpop.permute.xlu0 %1297
        %1299 = vrot.lane.b32.xlu0 %v1252, 112
        %v1300 = vpop.permute.xlu0 %1299
        %1301 = vrot.lane.b32.xlu0 %v1254, 112
        %v1302 = vpop.permute.xlu0 %1301
        %1303 = vrot.lane.b32.xlu0 %v1256, 112
        %v1304 = vpop.permute.xlu0 %1303
        %1305 = vrot.lane.b32.xlu0 %v1258, 112
        %v1306 = vpop.permute.xlu0 %1305
        %1307 = vrot.lane.b32.xlu0 %v1260, 112
        %v1308 = vpop.permute.xlu0 %1307
        %1309 = vrot.lane.b32.xlu0 %v1262, 112
        %v1310 = vpop.permute.xlu0 %1309
        %1311 = vrot.lane.b32.xlu0 %v1264, 112
        %v1312 = vpop.permute.xlu0 %1311
        %1313 = vrot.lane.b32.xlu0 %v1266, 112
        %v1314 = vpop.permute.xlu0 %1313
        %1315 = vrot.lane.b32.xlu0 %v1268, 112
        %v1316 = vpop.permute.xlu0 %1315
        %v1333 = vmul.f32 %v578, %v1286
        %v1334 = vmul.f32 %v579, %v1288
        %v1335 = vmul.f32 %v580, %v1290
        %v1336 = vmul.f32 %v581, %v1292
        %v1337 = vmul.f32 %v582, %v1294
        %v1338 = vmul.f32 %v583, %v1296
        %v1339 = vmul.f32 %v584, %v1298
        %v1340 = vmul.f32 %v585, %v1300
        %v1341 = vmul.f32 %v586, %v1302
        %v1342 = vmul.f32 %v587, %v1304
        %v1343 = vmul.f32 %v588, %v1306
        %v1344 = vmul.f32 %v589, %v1308
        %v1345 = vmul.f32 %v590, %v1310
        %v1346 = vmul.f32 %v591, %v1312
        %v1347 = vmul.f32 %v592, %v1314
        %v1348 = vmul.f32 %v593, %v1316
        %v1349 = vadd.f32 %v1182, %v1333
        %v1350 = vadd.f32 %v1184, %v1334
        %v1351 = vadd.f32 %v1187, %v1335
        %v1352 = vadd.f32 %v1189, %v1336
        %v1353 = vadd.f32 %v1192, %v1337
        %v1354 = vadd.f32 %v1194, %v1338
        %v1355 = vadd.f32 %v1197, %v1339
        %v1356 = vadd.f32 %v1199, %v1340
        %v1357 = vadd.f32 %v1202, %v1341
        %v1358 = vadd.f32 %v1204, %v1342
        %v1359 = vadd.f32 %v1207, %v1343
        %v1360 = vadd.f32 %v1209, %v1344
        %v1361 = vadd.f32 %v1212, %v1345
        %v1362 = vadd.f32 %v1214, %v1346
        %v1363 = vadd.f32 %v1217, %v1347
        %v1364 = vadd.f32 %v1219, %v1348
        %v1365 = vpack.c.bf16 %v1350, %v1349
        %v1366 = vpack.c.bf16 %v1352, %v1351
        %v1367 = vpack.c.bf16 %v1354, %v1353
        %v1368 = vpack.c.bf16 %v1356, %v1355
        %v1369 = vpack.c.bf16 %v1358, %v1357
        %v1370 = vpack.c.bf16 %v1360, %v1359
        %v1371 = vpack.c.bf16 %v1362, %v1361
        %v1372 = vpack.c.bf16 %v1364, %v1363
        %v1373 = vld [vmem:[#allocation11] sm:$0xf]
        %v1374 = vld [vmem:[#allocation11 + $0x4] sm:$0xf]
        %v1375 = vld [vmem:[%s8] sm:$0x1]
        %v1377 = vperm.slane %v1375, 0
        %1387 = vrot.lane.b32.xlu0 %v1365, 64
        %v1388 = vpop.permute.xlu0 %1387
        %1389 = vrot.lane.b32.xlu0 %v1366, 64
        %v1390 = vpop.permute.xlu0 %1389
        %1391 = vrot.lane.b32.xlu0 %v1367, 64
        %v1392 = vpop.permute.xlu0 %1391
        %1393 = vrot.lane.b32.xlu0 %v1368, 64
        %v1394 = vpop.permute.xlu0 %1393
        %1395 = vrot.lane.b32.xlu0 %v1369, 64
        %v1396 = vpop.permute.xlu0 %1395
        %1397 = vrot.lane.b32.xlu0 %v1370, 64
        %v1398 = vpop.permute.xlu0 %1397
        %1399 = vrot.lane.b32.xlu0 %v1371, 64
        %v1400 = vpop.permute.xlu0 %1399
        %1401 = vrot.lane.b32.xlu0 %v1372, 64
        %v1402 = vpop.permute.xlu0 %1401
        %v1405 = vunpack.c.l.b16 %v1373
        %v1406 = vunpack.c.l.b16 %v1374
        %v1407 = vpack.c.b16 %v1406, %v1405
        %vm1409 = vcmask 130048
        %v1411 = vsel %vm1409, %v1388, 0
        %v1414 = vsel %vm1409, %v1390, 0
        %v1417 = vsel %vm1409, %v1392, 0
        %v1420 = vsel %vm1409, %v1394, 0
        %v1423 = vsel %vm1409, %v1396, 0
        %v1426 = vsel %vm1409, %v1398, 0
        %v1429 = vsel %vm1409, %v1400, 0
        %v1432 = vsel %vm1409, %v1402, 0
        %1434 = vmatpush.bf16.msra.mxu0 0
        %1435 = vmatpush.bf16.msra.mxu0 0
        %1436 = vmatpush.bf16.msra.mxu0 0
        %1437 = vmatpush.bf16.msra.mxu0 0
        %1438 = vmatpush.bf16.msra.mxu0 0
        %1439 = vmatpush.bf16.msra.mxu0 0
        %1440 = vmatpush.bf16.msra.mxu0 0
        %1441 = vmatpush.bf16.msra.mxu0 %v1407
        %1442 = vmatmul.bf16.gmra.mxu0 %v1411
        %v1443 = vpop.f32.mrf.mxu0
        %v1444 = vadd.f32 %v1377, %v1443
        %v1445 = vpop.f32.mrf.mxu0
        %v1446 = vadd.f32 %v1377, %v1445
        %1447 = vmatmul.bf16.gmra.mxu0 %v1414
        %v1448 = vpop.f32.mrf.mxu0
        %v1449 = vadd.f32 %v1377, %v1448
        %v1450 = vpop.f32.mrf.mxu0
        %v1451 = vadd.f32 %v1377, %v1450
        %1452 = vmatmul.bf16.gmra.mxu0 %v1417
        %v1453 = vpop.f32.mrf.mxu0
        %v1454 = vadd.f32 %v1377, %v1453
        %v1455 = vpop.f32.mrf.mxu0
        %v1456 = vadd.f32 %v1377, %v1455
        %1457 = vmatmul.bf16.gmra.mxu0 %v1420
        %v1458 = vpop.f32.mrf.mxu0
        %v1459 = vadd.f32 %v1377, %v1458
        %v1460 = vpop.f32.mrf.mxu0
        %v1461 = vadd.f32 %v1377, %v1460
        %1462 = vmatmul.bf16.gmra.mxu0 %v1423
        %v1463 = vpop.f32.mrf.mxu0
        %v1464 = vadd.f32 %v1377, %v1463
        %v1465 = vpop.f32.mrf.mxu0
        %v1466 = vadd.f32 %v1377, %v1465
        %1467 = vmatmul.bf16.gmra.mxu0 %v1426
        %v1468 = vpop.f32.mrf.mxu0
        %v1469 = vadd.f32 %v1377, %v1468
        %v1470 = vpop.f32.mrf.mxu0
        %v1471 = vadd.f32 %v1377, %v1470
        %1472 = vmatmul.bf16.gmra.mxu0 %v1429
        %v1473 = vpop.f32.mrf.mxu0
        %v1474 = vadd.f32 %v1377, %v1473
        %v1475 = vpop.f32.mrf.mxu0
        %v1476 = vadd.f32 %v1377, %v1475
        %1477 = vmatmul.bf16.gmra.mxu0 %v1432
        %v1478 = vpop.f32.mrf.mxu0
        %v1479 = vadd.f32 %v1377, %v1478
        %v1480 = vpop.f32.mrf.mxu0
        %v1481 = vadd.f32 %v1377, %v1480
        %1482 = vdwg.mxu0
        %v1483 = vmax.f32 %v1444, 0.0
        %v1484 = vmax.f32 %v1446, 0.0
        %v1485 = vmax.f32 %v1449, 0.0
        %v1486 = vmax.f32 %v1451, 0.0
        %v1487 = vmax.f32 %v1454, 0.0
        %v1488 = vmax.f32 %v1456, 0.0
        %v1489 = vmax.f32 %v1459, 0.0
        %v1490 = vmax.f32 %v1461, 0.0
        %v1491 = vmax.f32 %v1464, 0.0
        %v1492 = vmax.f32 %v1466, 0.0
        %v1493 = vmax.f32 %v1469, 0.0
        %v1494 = vmax.f32 %v1471, 0.0
        %v1495 = vmax.f32 %v1474, 0.0
        %v1496 = vmax.f32 %v1476, 0.0
        %v1497 = vmax.f32 %v1479, 0.0
        %v1498 = vmax.f32 %v1481, 0.0
        %v1499 = vpack.c.bf16 %v1484, %v1483
        %v1500 = vpack.c.bf16 %v1486, %v1485
        %v1501 = vpack.c.bf16 %v1488, %v1487
        %v1502 = vpack.c.bf16 %v1490, %v1489
        %v1503 = vpack.c.bf16 %v1492, %v1491
        %v1504 = vpack.c.bf16 %v1494, %v1493
        %v1505 = vpack.c.bf16 %v1496, %v1495
        %v1506 = vpack.c.bf16 %v1498, %v1497
        %v1507 = vld [vmem:[#allocation13] sm:$0xff]
        %v1508 = vld [vmem:[#allocation13 + $0x8] sm:$0xff]
        %v1509 = vld [vmem:[#allocation13 + $0x10] sm:$0xff]
        %v1510 = vld [vmem:[#allocation13 + $0x18] sm:$0xff]
        %v1511 = vld [vmem:[#allocation13 + $0x20] sm:$0xff]
        %v1512 = vld [vmem:[#allocation13 + $0x28] sm:$0xff]
        %v1513 = vld [vmem:[#allocation13 + $0x30] sm:$0xff]
        %v1514 = vld [vmem:[#allocation13 + $0x38] sm:$0xff]
        %v1515 = vld [vmem:[#allocation13 + $0x40] sm:$0xff]
        %v1516 = vld [vmem:[#allocation13 + $0x48] sm:$0xff]
        %v1517 = vld [vmem:[#allocation13 + $0x50] sm:$0xff]
        %v1518 = vld [vmem:[#allocation13 + $0x58] sm:$0xff]
        %v1519 = vld [vmem:[#allocation13 + $0x60] sm:$0xff]
        %v1520 = vld [vmem:[#allocation13 + $0x68] sm:$0xff]
        %v1521 = vld [vmem:[#allocation13 + $0x70] sm:$0xff]
        %v1522 = vld [vmem:[#allocation13 + $0x78] sm:$0xff]
        %v1523 = vld [vmem:[%s10] sm:$0x3]
        %v1525 = vperm.slane %v1523, 0
        %v1526 = vperm.slane %v1523, 1
        %v1545 = vunpack.c.l.b16 %v1507
        %v1546 = vunpack.c.h.b16 %v1507
        %v1547 = vunpack.c.l.b16 %v1508
        %v1548 = vunpack.c.h.b16 %v1508
        %v1549 = vunpack.c.l.b16 %v1509
        %v1550 = vunpack.c.h.b16 %v1509
        %v1551 = vunpack.c.l.b16 %v1510
        %v1552 = vunpack.c.h.b16 %v1510
        %v1553 = vunpack.c.l.b16 %v1511
        %v1554 = vunpack.c.h.b16 %v1511
        %v1555 = vunpack.c.l.b16 %v1512
        %v1556 = vunpack.c.h.b16 %v1512
        %v1557 = vunpack.c.l.b16 %v1513
        %v1558 = vunpack.c.h.b16 %v1513
        %v1559 = vunpack.c.l.b16 %v1514
        %v1560 = vunpack.c.h.b16 %v1514
        %v1561 = vunpack.c.l.b16 %v1515
        %v1562 = vunpack.c.h.b16 %v1515
        %v1563 = vunpack.c.l.b16 %v1516
        %v1564 = vunpack.c.h.b16 %v1516
        %v1565 = vunpack.c.l.b16 %v1517
        %v1566 = vunpack.c.h.b16 %v1517
        %v1567 = vunpack.c.l.b16 %v1518
        %v1568 = vunpack.c.h.b16 %v1518
        %v1569 = vunpack.c.l.b16 %v1519
        %v1570 = vunpack.c.h.b16 %v1519
        %v1571 = vunpack.c.l.b16 %v1520
        %v1572 = vunpack.c.h.b16 %v1520
        %v1573 = vunpack.c.l.b16 %v1521
        %v1574 = vunpack.c.h.b16 %v1521
        %v1575 = vunpack.c.l.b16 %v1522
        %v1576 = vunpack.c.h.b16 %v1522
        %v1577 = vpack.c.b16 %v1547, %v1545
        %v1578 = vpack.c.b16 %v1548, %v1546
        %v1579 = vpack.c.b16 %v1551, %v1549
        %v1580 = vpack.c.b16 %v1552, %v1550
        %v1581 = vpack.c.b16 %v1555, %v1553
        %v1582 = vpack.c.b16 %v1556, %v1554
        %v1583 = vpack.c.b16 %v1559, %v1557
        %v1584 = vpack.c.b16 %v1560, %v1558
        %v1585 = vpack.c.b16 %v1563, %v1561
        %v1586 = vpack.c.b16 %v1564, %v1562
        %v1587 = vpack.c.b16 %v1567, %v1565
        %v1588 = vpack.c.b16 %v1568, %v1566
        %v1589 = vpack.c.b16 %v1571, %v1569
        %v1590 = vpack.c.b16 %v1572, %v1570
        %v1591 = vpack.c.b16 %v1575, %v1573
        %v1592 = vpack.c.b16 %v1576, %v1574
        %1609 = vmatpush.bf16.msra.mxu0 %v1591
        %1610 = vmatpush.bf16.msra.mxu0 %v1589
        %1611 = vmatpush.bf16.msra.mxu0 %v1587
        %1612 = vmatpush.bf16.msra.mxu0 %v1585
        %1613 = vmatpush.bf16.msra.mxu0 %v1583
        %1614 = vmatpush.bf16.msra.mxu0 %v1581
        %1615 = vmatpush.bf16.msra.mxu0 %v1579
        %1616 = vmatpush.bf16.msra.mxu0 %v1577
        %1617 = vmatmul.bf16.gmra.mxu0 %v1499
        %v1618 = vpop.f32.mrf.mxu0
        %v1619 = vadd.f32 %v1525, %v1618
        %v1620 = vpop.f32.mrf.mxu0
        %v1621 = vadd.f32 %v1525, %v1620
        %1622 = vmatmul.bf16.gmra.mxu0 %v1500
        %v1623 = vpop.f32.mrf.mxu0
        %v1624 = vadd.f32 %v1525, %v1623
        %v1625 = vpop.f32.mrf.mxu0
        %v1626 = vadd.f32 %v1525, %v1625
        %1627 = vmatmul.bf16.gmra.mxu0 %v1501
        %v1628 = vpop.f32.mrf.mxu0
        %v1629 = vadd.f32 %v1525, %v1628
        %v1630 = vpop.f32.mrf.mxu0
        %v1631 = vadd.f32 %v1525, %v1630
        %1632 = vmatmul.bf16.gmra.mxu0 %v1502
        %v1633 = vpop.f32.mrf.mxu0
        %v1634 = vadd.f32 %v1525, %v1633
        %v1635 = vpop.f32.mrf.mxu0
        %v1636 = vadd.f32 %v1525, %v1635
        %1637 = vmatmul.bf16.gmra.mxu0 %v1503
        %v1638 = vpop.f32.mrf.mxu0
        %v1639 = vadd.f32 %v1525, %v1638
        %v1640 = vpop.f32.mrf.mxu0
        %v1641 = vadd.f32 %v1525, %v1640
        %1642 = vmatmul.bf16.gmra.mxu0 %v1504
        %v1643 = vpop.f32.mrf.mxu0
        %v1644 = vadd.f32 %v1525, %v1643
        %v1645 = vpop.f32.mrf.mxu0
        %v1646 = vadd.f32 %v1525, %v1645
        %1647 = vmatmul.bf16.gmra.mxu0 %v1505
        %v1648 = vpop.f32.mrf.mxu0
        %v1649 = vadd.f32 %v1525, %v1648
        %v1650 = vpop.f32.mrf.mxu0
        %v1651 = vadd.f32 %v1525, %v1650
        %1652 = vmatmul.bf16.gmra.mxu0 %v1506
        %v1653 = vpop.f32.mrf.mxu0
        %v1654 = vadd.f32 %v1525, %v1653
        %v1655 = vpop.f32.mrf.mxu0
        %v1656 = vadd.f32 %v1525, %v1655
        %1657 = vdwg.mxu0
        %1658 = vmatpush.bf16.msra.mxu0 %v1592
        %1659 = vmatpush.bf16.msra.mxu0 %v1590
        %1660 = vmatpush.bf16.msra.mxu0 %v1588
        %1661 = vmatpush.bf16.msra.mxu0 %v1586
        %1662 = vmatpush.bf16.msra.mxu0 %v1584
        %1663 = vmatpush.bf16.msra.mxu0 %v1582
        %1664 = vmatpush.bf16.msra.mxu0 %v1580
        %1665 = vmatpush.bf16.msra.mxu0 %v1578
        %1666 = vmatmul.bf16.gmra.mxu0 %v1499
        %v1667 = vpop.f32.mrf.mxu0
        %v1668 = vadd.f32 %v1526, %v1667
        %v1669 = vpop.f32.mrf.mxu0
        %v1670 = vadd.f32 %v1526, %v1669
        %1671 = vmatmul.bf16.gmra.mxu0 %v1500
        %v1672 = vpop.f32.mrf.mxu0
        %v1673 = vadd.f32 %v1526, %v1672
        %v1674 = vpop.f32.mrf.mxu0
        %v1675 = vadd.f32 %v1526, %v1674
        %1676 = vmatmul.bf16.gmra.mxu0 %v1501
        %v1677 = vpop.f32.mrf.mxu0
        %v1678 = vadd.f32 %v1526, %v1677
        %v1679 = vpop.f32.mrf.mxu0
        %v1680 = vadd.f32 %v1526, %v1679
        %1681 = vmatmul.bf16.gmra.mxu0 %v1502
        %v1682 = vpop.f32.mrf.mxu0
        %v1683 = vadd.f32 %v1526, %v1682
        %v1684 = vpop.f32.mrf.mxu0
        %v1685 = vadd.f32 %v1526, %v1684
        %1686 = vmatmul.bf16.gmra.mxu0 %v1503
        %v1687 = vpop.f32.mrf.mxu0
        %v1688 = vadd.f32 %v1526, %v1687
        %v1689 = vpop.f32.mrf.mxu0
        %v1690 = vadd.f32 %v1526, %v1689
        %1691 = vmatmul.bf16.gmra.mxu0 %v1504
        %v1692 = vpop.f32.mrf.mxu0
        %v1693 = vadd.f32 %v1526, %v1692
        %v1694 = vpop.f32.mrf.mxu0
        %v1695 = vadd.f32 %v1526, %v1694
        %1696 = vmatmul.bf16.gmra.mxu0 %v1505
        %v1697 = vpop.f32.mrf.mxu0
        %v1698 = vadd.f32 %v1526, %v1697
        %v1699 = vpop.f32.mrf.mxu0
        %v1700 = vadd.f32 %v1526, %v1699
        %1701 = vmatmul.bf16.gmra.mxu0 %v1506
        %v1702 = vpop.f32.mrf.mxu0
        %v1703 = vadd.f32 %v1526, %v1702
        %v1704 = vpop.f32.mrf.mxu0
        %v1705 = vadd.f32 %v1526, %v1704
        %1706 = vdwg.mxu0
        %v1707 = vmax.f32 %v1619, 0.0
        %v1708 = vmax.f32 %v1668, 0.0
        %v1709 = vmax.f32 %v1621, 0.0
        %v1710 = vmax.f32 %v1670, 0.0
        %v1711 = vmax.f32 %v1624, 0.0
        %v1712 = vmax.f32 %v1673, 0.0
        %v1713 = vmax.f32 %v1626, 0.0
        %v1714 = vmax.f32 %v1675, 0.0
        %v1715 = vmax.f32 %v1629, 0.0
        %v1716 = vmax.f32 %v1678, 0.0
        %v1717 = vmax.f32 %v1631, 0.0
        %v1718 = vmax.f32 %v1680, 0.0
        %v1719 = vmax.f32 %v1634, 0.0
        %v1720 = vmax.f32 %v1683, 0.0
        %v1721 = vmax.f32 %v1636, 0.0
        %v1722 = vmax.f32 %v1685, 0.0
        %v1723 = vmax.f32 %v1639, 0.0
        %v1724 = vmax.f32 %v1688, 0.0
        %v1725 = vmax.f32 %v1641, 0.0
        %v1726 = vmax.f32 %v1690, 0.0
        %v1727 = vmax.f32 %v1644, 0.0
        %v1728 = vmax.f32 %v1693, 0.0
        %v1729 = vmax.f32 %v1646, 0.0
        %v1730 = vmax.f32 %v1695, 0.0
        %v1731 = vmax.f32 %v1649, 0.0
        %v1732 = vmax.f32 %v1698, 0.0
        %v1733 = vmax.f32 %v1651, 0.0
        %v1734 = vmax.f32 %v1700, 0.0
        %v1735 = vmax.f32 %v1654, 0.0
        %v1736 = vmax.f32 %v1703, 0.0
        %v1737 = vmax.f32 %v1656, 0.0
        %v1738 = vmax.f32 %v1705, 0.0
        %v1739 = vpack.c.bf16 %v1709, %v1707
        %v1740 = vpack.c.bf16 %v1710, %v1708
        %v1741 = vpack.c.bf16 %v1713, %v1711
        %v1742 = vpack.c.bf16 %v1714, %v1712
        %v1743 = vpack.c.bf16 %v1717, %v1715
        %v1744 = vpack.c.bf16 %v1718, %v1716
        %v1745 = vpack.c.bf16 %v1721, %v1719
        %v1746 = vpack.c.bf16 %v1722, %v1720
        %v1747 = vpack.c.bf16 %v1725, %v1723
        %v1748 = vpack.c.bf16 %v1726, %v1724
        %v1749 = vpack.c.bf16 %v1729, %v1727
        %v1750 = vpack.c.bf16 %v1730, %v1728
        %v1751 = vpack.c.bf16 %v1733, %v1731
        %v1752 = vpack.c.bf16 %v1734, %v1732
        %v1753 = vpack.c.bf16 %v1737, %v1735
        %v1754 = vpack.c.bf16 %v1738, %v1736
        %v1755 = vld [vmem:[#allocation14] sm:$0xf]
        %v1756 = vld [vmem:[#allocation14 + $0x4] sm:$0xf]
        %v1757 = vld [vmem:[#allocation14 + $0x8] sm:$0xf]
        %v1758 = vld [vmem:[#allocation14 + $0xc] sm:$0xf]
        %v1759 = vld [vmem:[#allocation14 + $0x10] sm:$0xf]
        %v1760 = vld [vmem:[#allocation14 + $0x14] sm:$0xf]
        %v1761 = vld [vmem:[#allocation14 + $0x18] sm:$0xf]
        %v1762 = vld [vmem:[#allocation14 + $0x1c] sm:$0xf]
        %v1763 = vld [vmem:[#allocation14 + $0x20] sm:$0xf]
        %v1764 = vld [vmem:[#allocation14 + $0x24] sm:$0xf]
        %v1765 = vld [vmem:[#allocation14 + $0x28] sm:$0xf]
        %v1766 = vld [vmem:[#allocation14 + $0x2c] sm:$0xf]
        %v1767 = vld [vmem:[#allocation14 + $0x30] sm:$0xf]
        %v1768 = vld [vmem:[#allocation14 + $0x34] sm:$0xf]
        %v1769 = vld [vmem:[#allocation14 + $0x38] sm:$0xf]
        %v1770 = vld [vmem:[#allocation14 + $0x3c] sm:$0xf]
        %v1771 = vld [vmem:[#allocation14 + $0x40] sm:$0xf]
        %v1772 = vld [vmem:[#allocation14 + $0x44] sm:$0xf]
        %v1773 = vld [vmem:[#allocation14 + $0x48] sm:$0xf]
        %v1774 = vld [vmem:[#allocation14 + $0x4c] sm:$0xf]
        %v1775 = vld [vmem:[#allocation14 + $0x50] sm:$0xf]
        %v1776 = vld [vmem:[#allocation14 + $0x54] sm:$0xf]
        %v1777 = vld [vmem:[#allocation14 + $0x58] sm:$0xf]
        %v1778 = vld [vmem:[#allocation14 + $0x5c] sm:$0xf]
        %v1779 = vld [vmem:[#allocation14 + $0x60] sm:$0xf]
        %v1780 = vld [vmem:[#allocation14 + $0x64] sm:$0xf]
        %v1781 = vld [vmem:[#allocation14 + $0x68] sm:$0xf]
        %v1782 = vld [vmem:[#allocation14 + $0x6c] sm:$0xf]
        %v1783 = vld [vmem:[#allocation14 + $0x70] sm:$0xf]
        %v1784 = vld [vmem:[#allocation14 + $0x74] sm:$0xf]
        %v1785 = vld [vmem:[#allocation14 + $0x78] sm:$0xf]
        %v1786 = vld [vmem:[#allocation14 + $0x7c] sm:$0xf]
        %v1787 = vld [vmem:[%s12] sm:$0x1]
        %v1789 = vperm.slane %v1787, 0
        %v1823 = vunpack.c.l.b16 %v1755
        %v1824 = vunpack.c.l.b16 %v1756
        %v1825 = vunpack.c.l.b16 %v1757
        %v1826 = vunpack.c.l.b16 %v1758
        %v1827 = vunpack.c.l.b16 %v1759
        %v1828 = vunpack.c.l.b16 %v1760
        %v1829 = vunpack.c.l.b16 %v1761
        %v1830 = vunpack.c.l.b16 %v1762
        %v1831 = vunpack.c.l.b16 %v1763
        %v1832 = vunpack.c.l.b16 %v1764
        %v1833 = vunpack.c.l.b16 %v1765
        %v1834 = vunpack.c.l.b16 %v1766
        %v1835 = vunpack.c.l.b16 %v1767
        %v1836 = vunpack.c.l.b16 %v1768
        %v1837 = vunpack.c.l.b16 %v1769
        %v1838 = vunpack.c.l.b16 %v1770
        %v1839 = vunpack.c.l.b16 %v1771
        %v1840 = vunpack.c.l.b16 %v1772
        %v1841 = vunpack.c.l.b16 %v1773
        %v1842 = vunpack.c.l.b16 %v1774
        %v1843 = vunpack.c.l.b16 %v1775
        %v1844 = vunpack.c.l.b16 %v1776
        %v1845 = vunpack.c.l.b16 %v1777
        %v1846 = vunpack.c.l.b16 %v1778
        %v1847 = vunpack.c.l.b16 %v1779
        %v1848 = vunpack.c.l.b16 %v1780
        %v1849 = vunpack.c.l.b16 %v1781
        %v1850 = vunpack.c.l.b16 %v1782
        %v1851 = vunpack.c.l.b16 %v1783
        %v1852 = vunpack.c.l.b16 %v1784
        %v1853 = vunpack.c.l.b16 %v1785
        %v1854 = vunpack.c.l.b16 %v1786
        %v1855 = vpack.c.b16 %v1824, %v1823
        %v1856 = vpack.c.b16 %v1826, %v1825
        %v1857 = vpack.c.b16 %v1828, %v1827
        %v1858 = vpack.c.b16 %v1830, %v1829
        %v1859 = vpack.c.b16 %v1832, %v1831
        %v1860 = vpack.c.b16 %v1834, %v1833
        %v1861 = vpack.c.b16 %v1836, %v1835
        %v1862 = vpack.c.b16 %v1838, %v1837
        %v1863 = vpack.c.b16 %v1840, %v1839
        %v1864 = vpack.c.b16 %v1842, %v1841
        %v1865 = vpack.c.b16 %v1844, %v1843
        %v1866 = vpack.c.b16 %v1846, %v1845
        %v1867 = vpack.c.b16 %v1848, %v1847
        %v1868 = vpack.c.b16 %v1850, %v1849
        %v1869 = vpack.c.b16 %v1852, %v1851
        %v1870 = vpack.c.b16 %v1854, %v1853
        %1887 = vmatpush.bf16.msra.mxu0 %v1862
        %1888 = vmatpush.bf16.msra.mxu0 %v1861
        %1889 = vmatpush.bf16.msra.mxu0 %v1860
        %1890 = vmatpush.bf16.msra.mxu0 %v1859
        %1891 = vmatpush.bf16.msra.mxu0 %v1858
        %1892 = vmatpush.bf16.msra.mxu0 %v1857
        %1893 = vmatpush.bf16.msra.mxu0 %v1856
        %1894 = vmatpush.bf16.msra.mxu0 %v1855
        %1895 = vmatmul.bf16.gmra.mxu0 %v1739
        %v1896 = vpop.f32.mrf.mxu0
        %v1897 = vadd.f32 %v1789, %v1896
        %v1898 = vpop.f32.mrf.mxu0
        %v1899 = vadd.f32 %v1789, %v1898
        %1900 = vmatmul.bf16.gmra.mxu0 %v1741
        %v1901 = vpop.f32.mrf.mxu0
        %v1902 = vadd.f32 %v1789, %v1901
        %v1903 = vpop.f32.mrf.mxu0
        %v1904 = vadd.f32 %v1789, %v1903
        %1905 = vmatmul.bf16.gmra.mxu0 %v1743
        %v1906 = vpop.f32.mrf.mxu0
        %v1907 = vadd.f32 %v1789, %v1906
        %v1908 = vpop.f32.mrf.mxu0
        %v1909 = vadd.f32 %v1789, %v1908
        %1910 = vmatmul.bf16.gmra.mxu0 %v1745
        %v1911 = vpop.f32.mrf.mxu0
        %v1912 = vadd.f32 %v1789, %v1911
        %v1913 = vpop.f32.mrf.mxu0
        %v1914 = vadd.f32 %v1789, %v1913
        %1915 = vmatmul.bf16.gmra.mxu0 %v1747
        %v1916 = vpop.f32.mrf.mxu0
        %v1917 = vadd.f32 %v1789, %v1916
        %v1918 = vpop.f32.mrf.mxu0
        %v1919 = vadd.f32 %v1789, %v1918
        %1920 = vmatmul.bf16.gmra.mxu0 %v1749
        %v1921 = vpop.f32.mrf.mxu0
        %v1922 = vadd.f32 %v1789, %v1921
        %v1923 = vpop.f32.mrf.mxu0
        %v1924 = vadd.f32 %v1789, %v1923
        %1925 = vmatmul.bf16.gmra.mxu0 %v1751
        %v1926 = vpop.f32.mrf.mxu0
        %v1927 = vadd.f32 %v1789, %v1926
        %v1928 = vpop.f32.mrf.mxu0
        %v1929 = vadd.f32 %v1789, %v1928
        %1930 = vmatmul.bf16.gmra.mxu0 %v1753
        %v1931 = vpop.f32.mrf.mxu0
        %v1932 = vadd.f32 %v1789, %v1931
        %v1933 = vpop.f32.mrf.mxu0
        %v1934 = vadd.f32 %v1789, %v1933
        %1935 = vdwg.mxu0
        %1936 = vmatpush.bf16.msra.mxu0 %v1870
        %1937 = vmatpush.bf16.msra.mxu0 %v1869
        %1938 = vmatpush.bf16.msra.mxu0 %v1868
        %1939 = vmatpush.bf16.msra.mxu0 %v1867
        %1940 = vmatpush.bf16.msra.mxu0 %v1866
        %1941 = vmatpush.bf16.msra.mxu0 %v1865
        %1942 = vmatpush.bf16.msra.mxu0 %v1864
        %1943 = vmatpush.bf16.msra.mxu0 %v1863
        %1944 = vmatmul.bf16.gmra.mxu0 %v1740
        %v1945 = vpop.f32.mrf.mxu0
        %v1946 = vadd.f32 %v1897, %v1945
        %v1947 = vpop.f32.mrf.mxu0
        %v1948 = vadd.f32 %v1899, %v1947
        %1949 = vmatmul.bf16.gmra.mxu0 %v1742
        %v1950 = vpop.f32.mrf.mxu0
        %v1951 = vadd.f32 %v1902, %v1950
        %v1952 = vpop.f32.mrf.mxu0
        %v1953 = vadd.f32 %v1904, %v1952
        %1954 = vmatmul.bf16.gmra.mxu0 %v1744
        %v1955 = vpop.f32.mrf.mxu0
        %v1956 = vadd.f32 %v1907, %v1955
        %v1957 = vpop.f32.mrf.mxu0
        %v1958 = vadd.f32 %v1909, %v1957
        %1959 = vmatmul.bf16.gmra.mxu0 %v1746
        %v1960 = vpop.f32.mrf.mxu0
        %v1961 = vadd.f32 %v1912, %v1960
        %v1962 = vpop.f32.mrf.mxu0
        %v1963 = vadd.f32 %v1914, %v1962
        %1964 = vmatmul.bf16.gmra.mxu0 %v1748
        %v1965 = vpop.f32.mrf.mxu0
        %v1966 = vadd.f32 %v1917, %v1965
        %v1967 = vpop.f32.mrf.mxu0
        %v1968 = vadd.f32 %v1919, %v1967
        %1969 = vmatmul.bf16.gmra.mxu0 %v1750
        %v1970 = vpop.f32.mrf.mxu0
        %v1971 = vadd.f32 %v1922, %v1970
        %v1972 = vpop.f32.mrf.mxu0
        %v1973 = vadd.f32 %v1924, %v1972
        %1974 = vmatmul.bf16.gmra.mxu0 %v1752
        %v1975 = vpop.f32.mrf.mxu0
        %v1976 = vadd.f32 %v1927, %v1975
        %v1977 = vpop.f32.mrf.mxu0
        %v1978 = vadd.f32 %v1929, %v1977
        %1979 = vmatmul.bf16.gmra.mxu0 %v1754
        %v1980 = vpop.f32.mrf.mxu0
        %v1981 = vadd.f32 %v1932, %v1980
        %v1982 = vpop.f32.mrf.mxu0
        %v1983 = vadd.f32 %v1934, %v1982
        %1984 = vdwg.mxu0
        %v1985 = vadd.f32 %v1946, %v1182
        %v1986 = vadd.f32 %v1948, %v1184
        %v1987 = vadd.f32 %v1951, %v1187
        %v1988 = vadd.f32 %v1953, %v1189
        %v1989 = vadd.f32 %v1956, %v1192
        %v1990 = vadd.f32 %v1958, %v1194
        %v1991 = vadd.f32 %v1961, %v1197
        %v1992 = vadd.f32 %v1963, %v1199
        %v1993 = vadd.f32 %v1966, %v1202
        %v1994 = vadd.f32 %v1968, %v1204
        %v1995 = vadd.f32 %v1971, %v1207
        %v1996 = vadd.f32 %v1973, %v1209
        %v1997 = vadd.f32 %v1976, %v1212
        %v1998 = vadd.f32 %v1978, %v1214
        %v1999 = vadd.f32 %v1981, %v1217
        %v2000 = vadd.f32 %v1983, %v1219
        %2001 = vst [vmem:[%s574] sm:$0xff] %v1985
        %2002 = vst [vmem:[%s574 + $0x8] sm:$0xff] %v1986
        %2003 = vst [vmem:[%s574 + $0x10] sm:$0xff] %v1987
        %2004 = vst [vmem:[%s574 + $0x18] sm:$0xff] %v1988
        %2005 = vst [vmem:[%s574 + $0x20] sm:$0xff] %v1989
        %2006 = vst [vmem:[%s574 + $0x28] sm:$0xff] %v1990
        %2007 = vst [vmem:[%s574 + $0x30] sm:$0xff] %v1991
        %2008 = vst [vmem:[%s574 + $0x38] sm:$0xff] %v1992
        %2009 = vst [vmem:[%s574 + $0x40] sm:$0xff] %v1993
        %2010 = vst [vmem:[%s574 + $0x48] sm:$0xff] %v1994
        %2011 = vst [vmem:[%s574 + $0x50] sm:$0xff] %v1995
        %2012 = vst [vmem:[%s574 + $0x58] sm:$0xff] %v1996
        %2013 = vst [vmem:[%s574 + $0x60] sm:$0xff] %v1997
        %2014 = vst [vmem:[%s574 + $0x68] sm:$0xff] %v1998
        %2015 = vst [vmem:[%s574 + $0x70] sm:$0xff] %v1999
        %2016 = vst [vmem:[%s574 + $0x78] sm:$0xff] %v2000
        %s2017 = sand.u32 %s320, 1
        %s2018 = scalar_lea.sflag [#allocation4], %s2017
        %s2019 = sand.u32 %s320, 1
        %s2020 = smul.addr %s2019, 128
        %s2021 = scalar_lea.vmem [#allocation16], %s2020
        // Predicated region
        $region105: #{tpu_custom_call.1} parent=71 // pred_check
          %p2022 = pneg %p330
        $region106: #{tpu_custom_call.1} parent=71 // pred_check_branch
          %2024 = sbr.rel (%p2022) target = $region108
        $region107: #{tpu_custom_call.1} parent=71 // pred_region
          %s2025 = smul.u32 16, %s34
          %2027 = vsyncadd %s2018, 0
          %s2028 = smul.addr %s2025, 8
          %s2029 = scalar_lea.hbm %s13, %s2028
          %s2030 = sshll.u32 %s2021, 4
          %s2031 = int_to_ptr.vmem [resolvable:$true] %s2030
          %s2032 = sshll.u32 %s2029, 4
          %s2033 = int_to_ptr.hbm [resolvable:$true] %s2032
          %2038 = dma.vmem_to_hbm [thread:$0]  %s2031, 2048, %s2033, %s2018, 128, 128, 8
        $region108: #{tpu_custom_call.1} parent=71 // pred_fallthru
          _
      $region72: #{tpu_custom_call.1} parent=5 // pred_fallthru
        _
      %p2039 = scmp.le.s32.totalorder 2, %s29
      // Predicated region
      $region109: #{tpu_custom_call.1} parent=5 // pred_check
        %p2040 = pneg %p2039
      $region110: #{tpu_custom_call.1} parent=5 // pred_check_branch
        %2042 = sbr.rel (%p2040) target = $region112
      $region111: #{tpu_custom_call.1} parent=5 // pred_region
        %s2043 = ssub.s32 %s29, 2
        // Predicated region
        $region113: #{tpu_custom_call.1} parent=111 // pred_check
          %p2044 = pneg %p336
        $region114: #{tpu_custom_call.1} parent=111 // pred_check_branch
          %2046 = sbr.rel (%p2044) target = $region116
        $region115: #{tpu_custom_call.1} parent=111 // pred_region
          %s2047 = sand.u32 %s321, 1
          %s2048 = scalar_lea.sflag [#allocation4], %s2047
          %s2049 = sand.u32 %s321, 1
          %s2050 = smul.addr %s2049, 128
          %s2051 = scalar_lea.vmem [#allocation16], %s2050
          %2053 = dma.done %s2048, 2048
        $region116: #{tpu_custom_call.1} parent=111 // pred_fallthru
          _
      $region112: #{tpu_custom_call.1} parent=5 // pred_fallthru
        _
    $region6: #{tpu_custom_call.1} parent=1 // loop_footer
      %s33 = sadd.s32 1, %s29
    $region7: #{tpu_custom_call.1} parent=1 // loop_footer_branch
      %28 = sbr.rel target = $region3
    $region8: #{tpu_custom_call.1} parent=1 // loop_exit
      _
    %2054 = vsyncpa [#allocation3], 1
    %s2055 = scalar_lea.sflag [#allocation3], 1
    %2056 = vsyncpa %s2055, 1
    %2057 = vsyncpa [#allocation6], 1
    %2058 = vsyncpa [#allocation9], 1
    %2059 = vsyncpa [#allocation12], 1
    %2060 = vsyncpa [#allocation15], 1
    %2061 = vsyncpa [#allocation4], 1
    %s2062 = scalar_lea.sflag [#allocation4], 1
    %2063 = vsyncpa %s2062, 1

</llo_original>
